<compile_context>
chip_gen: v7x
topology: tpu7x:2x2x1
jax: 0.10.0
libtpu: 0.0.40
codegen_flags: <defaults>
</compile_context>

<pallas_src>
import jax
import jax.numpy as jnp
from jax import lax
from jax.experimental import pallas as pl
from jax.experimental.pallas import tpu as pltpu


def _round_up(a, b):
    return ((a + b - 1) // b) * b


def _head_kernel(x_ref, w1t_ref, b1_ref, w2f_ref, b2_ref,
                 fc1w_ref, fc1b_ref, fc2w_ref, fc2b_ref, out_ref):
    # x_ref:    (TN, 2*Lh) f32    de-interleaved: [:, :Lh] even samples, [:, Lh:] odd
    # w1t_ref:  (K1, 2*C1) f32    conv1 weights tiled to 128 lanes (w1[k,c] repeated)
    # b1_ref:   (1, C1)    f32
    # w2f_ref:  (K2*C1, C2) bf16  conv2 weights, w2f[k*C1+ci, co] == torch_w2[co, ci, k]
    # b2_ref:   (1, C2)    f32
    # fc1w_ref: (C2, H)    bf16   torch_fc1.weight.T scaled by 1/L2 (avg-pool folded in)
    # fc1b_ref: (1, H)     f32
    # fc2w_ref: (H, NCp)   bf16   torch_fc2.weight.T zero-padded to NCp lanes
    # fc2b_ref: (1, NCp)   f32    bias, padded classes set to -1e30
    # out_ref:  (TN, NCp)  f32    lane-dense softmax probabilities
    TN, Lh2 = x_ref.shape
    Lh = Lh2 // 2
    K1, C1x2 = w1t_ref.shape
    C1 = C1x2 // 2
    KC, C2 = w2f_ref.shape
    K2 = KC // C1
    L1 = 2 * Lh - K1 + 1          # conv1 output length
    Lp = L1 // 2                  # after MaxPool1d(2)
    L2 = Lp - K2 + 1              # conv2 output length
    L2p = _round_up(L2, 8)        # sublane-aligned im2col row count
    Lpp = L2p + K2 - 1

    x = x_ref[...]                # (TN, 2*Lh)
    xe = x[:, :Lh]                # even-indexed samples
    xo = x[:, Lh:]                # odd-indexed samples

    # Packed broadcast staging (built once): lanes [0:C1] / [C1:2*C1] hold the x value
    # feeding pooling parity 0 / 1 respectively.  Even taps read xbp, odd taps xbq.
    xbp = jnp.concatenate(
        [jnp.broadcast_to(xe[:, :, None], (TN, Lh, C1)),
         jnp.broadcast_to(xo[:, :, None], (TN, Lh, C1))], axis=-1)        # (TN, Lh, 2*C1)
    if K1 > 1:
        xbq = jnp.concatenate(
            [jnp.broadcast_to(xo[:, :Lh - 1, None], (TN, Lh - 1, C1)),
             jnp.broadcast_to(xe[:, 1:, None], (TN, Lh - 1, C1))], axis=-1)
    else:
        xbq = None

    # --- conv1: lane-packed 128-wide accumulator, one full-width FMA per tap ---
    # parity p output at t uses x[2t+p+k] = half (p+k)%2, offset t+(p+k)//2.
    w1t = w1t_ref[...]            # (K1, 2*C1)
    acc = jnp.zeros((TN, Lp, 2 * C1), jnp.float32)
    for k in range(K1):
        wk = w1t[k][None, None, :]
        if k % 2 == 0:
            m = k // 2
            acc = acc + xbp[:, m:m + Lp, :] * wk
        else:
            m = (k - 1) // 2
            acc = acc + xbq[:, m:m + Lp, :] * wk

    # parity max (lane-half max), then bias + ReLU (relu/maxpool commute).
    pm = jnp.maximum(acc[:, :, :C1], acc[:, :, C1:])                      # (TN, Lp, C1)
    h = jnp.maximum(pm + b1_ref[...], 0.0)

    # --- conv2 + ReLU + global pool as one im2col MXU matmul (bf16 in, f32 acc) ---
    hb = h.astype(jnp.bfloat16)                                           # cast BEFORE im2col
    if Lpp > Lp:
        hb = jnp.concatenate(
            [hb, jnp.zeros((TN, Lpp - Lp, C1), jnp.bfloat16)], axis=1)    # (TN, Lpp, C1)
    hc = jnp.concatenate([hb[:, k:k + L2p, :] for k in range(K2)], axis=-1)  # (TN, L2p, K2*C1)
    hc2 = hc.reshape(TN * L2p, KC)          # L2p % 8 == 0 -> layout-trivial reshape
    y2 = jnp.dot(hc2, w2f_ref[...], preferred_element_type=jnp.float32)  # (TN*L2p, C2)
    y2 = jnp.maximum(y2.reshape(TN, L2p, C2) + b2_ref[...], 0.0)
    g = jnp.sum(y2[:, :L2, :], axis=1)      # (TN, C2); 1/L2 of the mean folded into fc1w

    # --- fc1 -> fc2 (lane-dense padded logits) -> softmax (f32) ---
    h1 = jnp.dot(g.astype(jnp.bfloat16), fc1w_ref[...],
                 preferred_element_type=jnp.float32) + fc1b_ref[...]      # (TN, H)
    logits = jnp.dot(h1.astype(jnp.bfloat16), fc2w_ref[...],
                     preferred_element_type=jnp.float32) + fc2b_ref[...]  # (TN, NCp)
    z = logits - jnp.max(logits, axis=-1, keepdims=True)
    e = jnp.exp(z)
    out_ref[...] = e * pl.reciprocal(jnp.sum(e, axis=-1, keepdims=True), approx=False)


def classification_head(x_nchw, params):
    """x_nchw: (N, 1, L) float32 — same convention as the PyTorch module."""
    w1, b1, w2, b2, fc1w, fc1b, fc2w, fc2b = params
    N, _, L = x_nchw.shape
    Lh = L // 2
    K1, C1 = w1.shape
    K2, _, C2 = w2.shape
    H = fc1w.shape[1]
    num_classes = fc2w.shape[1]
    L1 = 2 * Lh - K1 + 1
    Lp = L1 // 2
    L2 = Lp - K2 + 1
    assert Lh >= 2 and Lp >= 1 and L2 >= 1, "sequence too short for this head"
    NC_PAD = _round_up(num_classes, 128)
    L2p = _round_up(L2, 8)

    # glue: squeeze channel, de-interleave -> flat (N, 2*Lh): [even half | odd half]
    xs = x_nchw[:, 0, :2 * Lh].astype(jnp.float32)
    x_flat = jnp.concatenate([xs[:, 0::2], xs[:, 1::2]], axis=-1)

    # --- per-chip VMEM budget and batch-tile (TN) selection ---
    try:
        info = pltpu.get_tpu_info()
        vmem_cap = int(getattr(info, "vmem_capacity_bytes", 64 * 1024 * 1024))
    except Exception:
        vmem_cap = 64 * 1024 * 1024                     # conservative (v7x per-TC)
    vmem_limit = min((vmem_cap * 3) // 4, 100 * 1024 * 1024)

    per_sample = (4 * 2 * Lh * 2                        # x tile (double-buffered)
                  + 4 * 2 * C1 * (2 * Lh)               # xbp + xbq staging
                  + 4 * 2 * C1 * Lp                     # conv1 accumulator
                  + 6 * C1 * Lp                         # h f32 + bf16 copy
                  + 2 * K2 * C1 * L2p                   # im2col (bf16)
                  + 4 * C2 * L2p                        # conv2 output
                  + 4 * NC_PAD * 2)                     # output tile (double-buffered)
    budget = max(vmem_limit // 2, 8 * 1024 * 1024)
    cap = max(8, min(128, (budget // per_sample) // 8 * 8))

    N8 = _round_up(max(N, 1), 8)
    if N8 >= 16:                                        # keep >=2 grid steps (v7x 2 cores)
        cap = min(cap, max(8, (N8 // 2) // 8 * 8))
    best_tn, best_score = 8, None
    for tn in range(8, cap + 1, 8):                     # minimize padding + step overhead
        n_pad = _round_up(N, tn)
        score = n_pad + 8 * (n_pad // tn)
        if best_score is None or score <= best_score:
            best_tn, best_score = tn, score
    TN = best_tn
    N_pad = _round_up(N, TN)
    if N_pad != N:
        x_flat = jnp.pad(x_flat, ((0, N_pad - N), (0, 0)))

    # host-side constant folding (runs once on weights).
    w1t = jnp.tile(w1.astype(jnp.float32), (1, 2))                # (K1, 2*C1) lane-tiled
    w2f = w2.reshape(K2 * C1, C2).astype(jnp.bfloat16)            # im2col layout
    fc1w_s = (fc1w / float(L2)).astype(jnp.bfloat16)              # fold avg-pool scale
    fc2w_p = jnp.zeros((H, NC_PAD), jnp.float32).at[:, :num_classes].set(fc2w)
    fc2w_p = fc2w_p.astype(jnp.bfloat16)
    fc2b_p = jnp.full((1, NC_PAD), -1e30, jnp.float32).at[:, :num_classes].set(fc2b)

    out = pl.pallas_call(
        _head_kernel,
        out_shape=jax.ShapeDtypeStruct((N_pad, NC_PAD), jnp.float32),
        grid=(N_pad // TN,),
        in_specs=[
            pl.BlockSpec((TN, 2 * Lh), lambda i: (i, 0)),          # x: pipelined per tile
            pl.BlockSpec((K1, 2 * C1), lambda i: (0, 0)),          # weights: VMEM-resident
            pl.BlockSpec((1, C1), lambda i: (0, 0)),
            pl.BlockSpec((K2 * C1, C2), lambda i: (0, 0)),
            pl.BlockSpec((1, C2), lambda i: (0, 0)),
            pl.BlockSpec((C2, H), lambda i: (0, 0)),
            pl.BlockSpec((1, H), lambda i: (0, 0)),
            pl.BlockSpec((H, NC_PAD), lambda i: (0, 0)),
            pl.BlockSpec((1, NC_PAD), lambda i: (0, 0)),
        ],
        out_specs=pl.BlockSpec((TN, NC_PAD), lambda i: (i, 0)),
        compiler_params=pltpu.CompilerParams(
            dimension_semantics=("parallel",),
            vmem_limit_bytes=int(vmem_limit)),
    )(x_flat, w1t, b1.astype(jnp.float32), w2f, b2.astype(jnp.float32),
      fc1w_s, fc1b.astype(jnp.float32), fc2w_p, fc2b_p)

    return out[:N, :num_classes]


def reference(x_nchw, params):
    """Pure-JAX f32 reference with standard conv/pool ops (validation only)."""
    w1, b1, w2, b2, fc1w, fc1b, fc2w, fc2b = params
    w1_oih = jnp.transpose(w1, (1, 0))[:, None, :]                # (C1, 1, K1)
    y = lax.conv_general_dilated(x_nchw, w1_oih, (1,), 'VALID',
                                 dimension_numbers=('NCH', 'OIH', 'NCH'))
    y = jnp.maximum(y + b1.reshape(1, -1, 1), 0.0)
    y = lax.reduce_window(y, -jnp.inf, lax.max, (1, 1, 2), (1, 1, 2), 'VALID')
    w2_oih = jnp.transpose(w2, (2, 1, 0))                         # (C2, C1, K2)
    y = lax.conv_general_dilated(y, w2_oih, (1,), 'VALID',
                                 dimension_numbers=('NCH', 'OIH', 'NCH'))
    y = jnp.maximum(y + b2.reshape(1, -1, 1), 0.0)
    y = jnp.mean(y, axis=2)                                       # (N, C2)
    y = y @ fc1w + fc1b
    y = y @ fc2w + fc2b
    return jax.nn.softmax(y, axis=1)


def make_params(key, num_classes=10):
    """Deterministic PyTorch-style (uniform) init; layouts documented in _head_kernel."""
    C1, K1, C2, K2, H = 64, 5, 128, 3, 128
    ks = jax.random.split(key, 8)

    def u(k, shape, fan_in):
        bound = fan_in ** -0.5
        return jax.random.uniform(k, shape, jnp.float32, -bound, bound)

    w1 = u(ks[0], (K1, C1), 1 * K1)
    b1 = u(ks[1], (1, C1), 1 * K1)
    w2 = u(ks[2], (K2, C1, C2), C1 * K2)
    b2 = u(ks[3], (1, C2), C1 * K2)
    fc1w = u(ks[4], (C2, H), C2)
    fc1b = u(ks[5], (1, H), C2)
    fc2w = u(ks[6], (H, num_classes), H)
    fc2b = u(ks[7], (1, num_classes), H)
    return (w1, b1, w2, b2, fc1w, fc1b, fc2w, fc2b)


if __name__ == "__main__":
    key = jax.random.PRNGKey(0)
    k_params, k_x1, k_x2 = jax.random.split(key, 3)
    num_classes = 10
    params = make_params(k_params, num_classes)

    # even-L and odd-L inputs (odd L exercises the dropped trailing sample path).
    for shape, kx in (((2, 1, 32), k_x1), ((3, 1, 33), k_x2)):
        x = jax.random.normal(kx, shape, jnp.float32)
        out = jax.block_until_ready(classification_head(x, params))
        ref = jax.block_until_ready(reference(x, params))
        assert out.shape == (shape[0], num_classes)
        assert jnp.allclose(jnp.sum(out, axis=1), 1.0, atol=1e-4)
        # bf16 MXU paths (f32 accumulation) -> loosened tolerance vs. the f32 reference.
        assert jnp.allclose(out, ref, rtol=5e-2, atol=1e-2), (out, ref)

    print("KERNEL_OK")
</pallas_src>

<mosaic_0001>
module attributes {stable_mosaic.version = 11 : i64} {
  func.func @_head_kernel(%arg0: i32, %arg1: memref<8x32xf32, #tpu.memory_space<vmem>>, %arg2: memref<5x128xf32, #tpu.memory_space<vmem>>, %arg3: memref<1x64xf32, #tpu.memory_space<vmem>>, %arg4: memref<192x128xbf16, #tpu.memory_space<vmem>>, %arg5: memref<1x128xf32, #tpu.memory_space<vmem>>, %arg6: memref<128x128xbf16, #tpu.memory_space<vmem>>, %arg7: memref<1x128xf32, #tpu.memory_space<vmem>>, %arg8: memref<128x128xbf16, #tpu.memory_space<vmem>>, %arg9: memref<1x128xf32, #tpu.memory_space<vmem>>, %arg10: memref<8x128xf32, #tpu.memory_space<vmem>>) attributes {dimension_semantics = [#tpu.dimension_semantics<parallel>], iteration_bounds = array<i64: 1>, scalar_prefetch = 0 : i64, scratch_operands = 0 : i64, tpu.core_type = #tpu.core_type<tc>, window_params = [{transform_indices = @transform_0, window_bounds = array<i64: 8, 32>}, {pipeline_mode = #tpu.pipeline_mode<synchronous>, transform_indices = @transform_1, window_bounds = array<i64: 5, 128>}, {pipeline_mode = #tpu.pipeline_mode<synchronous>, transform_indices = @transform_2, window_bounds = array<i64: 1, 64>}, {pipeline_mode = #tpu.pipeline_mode<synchronous>, transform_indices = @transform_3, window_bounds = array<i64: 192, 128>}, {pipeline_mode = #tpu.pipeline_mode<synchronous>, transform_indices = @transform_4, window_bounds = array<i64: 1, 128>}, {pipeline_mode = #tpu.pipeline_mode<synchronous>, transform_indices = @transform_5, window_bounds = array<i64: 128, 128>}, {pipeline_mode = #tpu.pipeline_mode<synchronous>, transform_indices = @transform_6, window_bounds = array<i64: 1, 128>}, {pipeline_mode = #tpu.pipeline_mode<synchronous>, transform_indices = @transform_7, window_bounds = array<i64: 128, 128>}, {pipeline_mode = #tpu.pipeline_mode<synchronous>, transform_indices = @transform_8, window_bounds = array<i64: 1, 128>}, {transform_indices = @transform_9, window_bounds = array<i64: 8, 128>}]} {
    %c0 = arith.constant 0 : index
    %c0_0 = arith.constant 0 : index
    %0 = vector.load %arg1[%c0, %c0_0] : memref<8x32xf32, #tpu.memory_space<vmem>>, vector<8x32xf32>
    %1 = vector.extract_strided_slice %0 {offsets = [0, 0], sizes = [8, 16], strides = [1, 1]} : vector<8x32xf32> to vector<8x16xf32>
    %2 = vector.extract_strided_slice %0 {offsets = [0, 16], sizes = [8, 16], strides = [1, 1]} : vector<8x32xf32> to vector<8x16xf32>
    %3 = vector.shape_cast %1 : vector<8x16xf32> to vector<8x16x1xf32>
    %4 = vector.shape_cast %3 : vector<8x16x1xf32> to vector<8x16x1xf32>
    %5 = vector.broadcast %4 : vector<8x16x1xf32> to vector<8x16x64xf32>
    %6 = vector.shape_cast %2 : vector<8x16xf32> to vector<8x16x1xf32>
    %7 = vector.shape_cast %6 : vector<8x16x1xf32> to vector<8x16x1xf32>
    %8 = vector.broadcast %7 : vector<8x16x1xf32> to vector<8x16x64xf32>
    %9 = tpu.concatenate %5, %8 in 2 : vector<8x16x64xf32>, vector<8x16x64xf32> -> vector<8x16x128xf32>
    %10 = vector.extract_strided_slice %2 {offsets = [0, 0], sizes = [8, 15], strides = [1, 1]} : vector<8x16xf32> to vector<8x15xf32>
    %11 = vector.shape_cast %10 : vector<8x15xf32> to vector<8x15x1xf32>
    %12 = vector.shape_cast %11 : vector<8x15x1xf32> to vector<8x15x1xf32>
    %13 = vector.broadcast %12 : vector<8x15x1xf32> to vector<8x15x64xf32>
    %14 = vector.extract_strided_slice %1 {offsets = [0, 1], sizes = [8, 15], strides = [1, 1]} : vector<8x16xf32> to vector<8x15xf32>
    %15 = vector.shape_cast %14 : vector<8x15xf32> to vector<8x15x1xf32>
    %16 = vector.shape_cast %15 : vector<8x15x1xf32> to vector<8x15x1xf32>
    %17 = vector.broadcast %16 : vector<8x15x1xf32> to vector<8x15x64xf32>
    %18 = tpu.concatenate %13, %17 in 2 : vector<8x15x64xf32>, vector<8x15x64xf32> -> vector<8x15x128xf32>
    %c0_1 = arith.constant 0 : index
    %c0_2 = arith.constant 0 : index
    %19 = vector.load %arg2[%c0_1, %c0_2] : memref<5x128xf32, #tpu.memory_space<vmem>>, vector<5x128xf32>
    %cst = arith.constant 0.000000e+00 : f32
    %20 = vector.broadcast %cst : f32 to vector<8x14x128xf32>
    %21 = vector.extract_strided_slice %19 {offsets = [0, 0], sizes = [1, 128], strides = [1, 1]} : vector<5x128xf32> to vector<1x128xf32>
    %22 = vector.shape_cast %21 : vector<1x128xf32> to vector<128xf32>
    %23 = vector.shape_cast %22 : vector<128xf32> to vector<1x1x128xf32>
    %24 = vector.extract_strided_slice %9 {offsets = [0, 0, 0], sizes = [8, 14, 128], strides = [1, 1, 1]} : vector<8x16x128xf32> to vector<8x14x128xf32>
    %25 = vector.broadcast %23 : vector<1x1x128xf32> to vector<8x14x128xf32>
    %26 = arith.mulf %24, %25 : vector<8x14x128xf32>
    %27 = arith.addf %20, %26 : vector<8x14x128xf32>
    %28 = vector.extract_strided_slice %19 {offsets = [1, 0], sizes = [1, 128], strides = [1, 1]} : vector<5x128xf32> to vector<1x128xf32>
    %29 = vector.shape_cast %28 : vector<1x128xf32> to vector<128xf32>
    %30 = vector.shape_cast %29 : vector<128xf32> to vector<1x1x128xf32>
    %31 = vector.extract_strided_slice %18 {offsets = [0, 0, 0], sizes = [8, 14, 128], strides = [1, 1, 1]} : vector<8x15x128xf32> to vector<8x14x128xf32>
    %32 = vector.broadcast %30 : vector<1x1x128xf32> to vector<8x14x128xf32>
    %33 = arith.mulf %31, %32 : vector<8x14x128xf32>
    %34 = arith.addf %27, %33 : vector<8x14x128xf32>
    %35 = vector.extract_strided_slice %19 {offsets = [2, 0], sizes = [1, 128], strides = [1, 1]} : vector<5x128xf32> to vector<1x128xf32>
    %36 = vector.shape_cast %35 : vector<1x128xf32> to vector<128xf32>
    %37 = vector.shape_cast %36 : vector<128xf32> to vector<1x1x128xf32>
    %38 = vector.extract_strided_slice %9 {offsets = [0, 1, 0], sizes = [8, 14, 128], strides = [1, 1, 1]} : vector<8x16x128xf32> to vector<8x14x128xf32>
    %39 = vector.broadcast %37 : vector<1x1x128xf32> to vector<8x14x128xf32>
    %40 = arith.mulf %38, %39 : vector<8x14x128xf32>
    %41 = arith.addf %34, %40 : vector<8x14x128xf32>
    %42 = vector.extract_strided_slice %19 {offsets = [3, 0], sizes = [1, 128], strides = [1, 1]} : vector<5x128xf32> to vector<1x128xf32>
    %43 = vector.shape_cast %42 : vector<1x128xf32> to vector<128xf32>
    %44 = vector.shape_cast %43 : vector<128xf32> to vector<1x1x128xf32>
    %45 = vector.extract_strided_slice %18 {offsets = [0, 1, 0], sizes = [8, 14, 128], strides = [1, 1, 1]} : vector<8x15x128xf32> to vector<8x14x128xf32>
    %46 = vector.broadcast %44 : vector<1x1x128xf32> to vector<8x14x128xf32>
    %47 = arith.mulf %45, %46 : vector<8x14x128xf32>
    %48 = arith.addf %41, %47 : vector<8x14x128xf32>
    %49 = vector.extract_strided_slice %19 {offsets = [4, 0], sizes = [1, 128], strides = [1, 1]} : vector<5x128xf32> to vector<1x128xf32>
    %50 = vector.shape_cast %49 : vector<1x128xf32> to vector<128xf32>
    %51 = vector.shape_cast %50 : vector<128xf32> to vector<1x1x128xf32>
    %52 = vector.extract_strided_slice %9 {offsets = [0, 2, 0], sizes = [8, 14, 128], strides = [1, 1, 1]} : vector<8x16x128xf32> to vector<8x14x128xf32>
    %53 = vector.broadcast %51 : vector<1x1x128xf32> to vector<8x14x128xf32>
    %54 = arith.mulf %52, %53 : vector<8x14x128xf32>
    %55 = arith.addf %48, %54 : vector<8x14x128xf32>
    %56 = vector.extract_strided_slice %55 {offsets = [0, 0, 0], sizes = [8, 14, 64], strides = [1, 1, 1]} : vector<8x14x128xf32> to vector<8x14x64xf32>
    %57 = vector.extract_strided_slice %55 {offsets = [0, 0, 64], sizes = [8, 14, 64], strides = [1, 1, 1]} : vector<8x14x128xf32> to vector<8x14x64xf32>
    %58 = arith.maximumf %56, %57 : vector<8x14x64xf32>
    %c0_3 = arith.constant 0 : index
    %c0_4 = arith.constant 0 : index
    %59 = vector.load %arg3[%c0_3, %c0_4] : memref<1x64xf32, #tpu.memory_space<vmem>>, vector<1x64xf32>
    %60 = vector.shape_cast %59 : vector<1x64xf32> to vector<1x1x64xf32>
    %61 = vector.broadcast %60 : vector<1x1x64xf32> to vector<8x14x64xf32>
    %62 = arith.addf %58, %61 : vector<8x14x64xf32>
    %cst_5 = arith.constant 0.000000e+00 : f32
    %63 = vector.broadcast %cst_5 : f32 to vector<8x14x64xf32>
    %64 = arith.maximumf %62, %63 : vector<8x14x64xf32>
    %65 = arith.truncf %64 : vector<8x14x64xf32> to vector<8x14x64xbf16>
    %cst_6 = arith.constant 0.000000e+00 : bf16
    %66 = vector.broadcast %cst_6 : bf16 to vector<8x4x64xbf16>
    %67 = tpu.concatenate %65, %66 in 1 : vector<8x14x64xbf16>, vector<8x4x64xbf16> -> vector<8x18x64xbf16>
    %68 = vector.extract_strided_slice %67 {offsets = [0, 0, 0], sizes = [8, 16, 64], strides = [1, 1, 1]} : vector<8x18x64xbf16> to vector<8x16x64xbf16>
    %69 = vector.extract_strided_slice %67 {offsets = [0, 1, 0], sizes = [8, 16, 64], strides = [1, 1, 1]} : vector<8x18x64xbf16> to vector<8x16x64xbf16>
    %70 = vector.extract_strided_slice %67 {offsets = [0, 2, 0], sizes = [8, 16, 64], strides = [1, 1, 1]} : vector<8x18x64xbf16> to vector<8x16x64xbf16>
    %71 = tpu.concatenate %68, %69, %70 in 2 : vector<8x16x64xbf16>, vector<8x16x64xbf16>, vector<8x16x64xbf16> -> vector<8x16x192xbf16>
    %72 = vector.shape_cast %71 : vector<8x16x192xbf16> to vector<128x192xbf16>
    %c0_7 = arith.constant 0 : index
    %c0_8 = arith.constant 0 : index
    %73 = vector.load %arg4[%c0_7, %c0_8] : memref<192x128xbf16, #tpu.memory_space<vmem>>, vector<192x128xbf16>
    %cst_9 = arith.constant dense<0.000000e+00> : vector<128x128xf32>
    %74 = tpu.matmul %72, %73, %cst_9 {dimension_numbers = #tpu.dot_dimension_numbers<[1], [0], [0], [1], [0, 0, 1, 1], [], []>} : vector<128x192xbf16>, vector<192x128xbf16>, vector<128x128xf32> -> vector<128x128xf32>
    %75 = vector.shape_cast %74 : vector<128x128xf32> to vector<8x16x128xf32>
    %c0_10 = arith.constant 0 : index
    %c0_11 = arith.constant 0 : index
    %76 = vector.load %arg5[%c0_10, %c0_11] : memref<1x128xf32, #tpu.memory_space<vmem>>, vector<1x128xf32>
    %77 = vector.shape_cast %76 : vector<1x128xf32> to vector<1x1x128xf32>
    %78 = vector.broadcast %77 : vector<1x1x128xf32> to vector<8x16x128xf32>
    %79 = arith.addf %75, %78 : vector<8x16x128xf32>
    %cst_12 = arith.constant 0.000000e+00 : f32
    %80 = vector.broadcast %cst_12 : f32 to vector<8x16x128xf32>
    %81 = arith.maximumf %79, %80 : vector<8x16x128xf32>
    %82 = vector.extract_strided_slice %81 {offsets = [0, 0, 0], sizes = [8, 12, 128], strides = [1, 1, 1]} : vector<8x16x128xf32> to vector<8x12x128xf32>
    %cst_13 = arith.constant dense<0.000000e+00> : vector<8x128xf32>
    %83 = vector.multi_reduction <add>, %82, %cst_13 [1] : vector<8x12x128xf32> to vector<8x128xf32>
    %84 = arith.truncf %83 : vector<8x128xf32> to vector<8x128xbf16>
    %c0_14 = arith.constant 0 : index
    %c0_15 = arith.constant 0 : index
    %85 = vector.load %arg6[%c0_14, %c0_15] : memref<128x128xbf16, #tpu.memory_space<vmem>>, vector<128x128xbf16>
    %cst_16 = arith.constant dense<0.000000e+00> : vector<8x128xf32>
    %86 = tpu.matmul %84, %85, %cst_16 {dimension_numbers = #tpu.dot_dimension_numbers<[1], [0], [0], [1], [0, 0, 1, 1], [], []>} : vector<8x128xbf16>, vector<128x128xbf16>, vector<8x128xf32> -> vector<8x128xf32>
    %c0_17 = arith.constant 0 : index
    %c0_18 = arith.constant 0 : index
    %87 = vector.load %arg7[%c0_17, %c0_18] : memref<1x128xf32, #tpu.memory_space<vmem>>, vector<1x128xf32>
    %88 = vector.broadcast %87 : vector<1x128xf32> to vector<8x128xf32>
    %89 = arith.addf %86, %88 : vector<8x128xf32>
    %90 = arith.truncf %89 : vector<8x128xf32> to vector<8x128xbf16>
    %c0_19 = arith.constant 0 : index
    %c0_20 = arith.constant 0 : index
    %91 = vector.load %arg8[%c0_19, %c0_20] : memref<128x128xbf16, #tpu.memory_space<vmem>>, vector<128x128xbf16>
    %cst_21 = arith.constant dense<0.000000e+00> : vector<8x128xf32>
    %92 = tpu.matmul %90, %91, %cst_21 {dimension_numbers = #tpu.dot_dimension_numbers<[1], [0], [0], [1], [0, 0, 1, 1], [], []>} : vector<8x128xbf16>, vector<128x128xbf16>, vector<8x128xf32> -> vector<8x128xf32>
    %c0_22 = arith.constant 0 : index
    %c0_23 = arith.constant 0 : index
    %93 = vector.load %arg9[%c0_22, %c0_23] : memref<1x128xf32, #tpu.memory_space<vmem>>, vector<1x128xf32>
    %94 = vector.broadcast %93 : vector<1x128xf32> to vector<8x128xf32>
    %95 = arith.addf %92, %94 : vector<8x128xf32>
    %cst_24 = arith.constant dense<0xFF800000> : vector<8xf32>
    %96 = vector.multi_reduction <maximumf>, %95, %cst_24 [1] : vector<8x128xf32> to vector<8xf32>
    %97 = vector.shape_cast %96 : vector<8xf32> to vector<8x1xf32>
    %98 = vector.broadcast %97 : vector<8x1xf32> to vector<8x128xf32>
    %99 = arith.subf %95, %98 : vector<8x128xf32>
    %100 = math.exp %99 : vector<8x128xf32>
    %cst_25 = arith.constant dense<0.000000e+00> : vector<8xf32>
    %101 = vector.multi_reduction <add>, %100, %cst_25 [1] : vector<8x128xf32> to vector<8xf32>
    %102 = vector.shape_cast %101 : vector<8xf32> to vector<8x1xf32>
    %103 = tpu.reciprocal %102 : vector<8x1xf32> -> vector<8x1xf32>
    %104 = vector.broadcast %103 : vector<8x1xf32> to vector<8x128xf32>
    %105 = arith.mulf %100, %104 : vector<8x128xf32>
    %c0_26 = arith.constant 0 : index
    %c0_27 = arith.constant 0 : index
    %106 = vector.load %arg10[%c0_26, %c0_27] : memref<8x128xf32, #tpu.memory_space<vmem>>, vector<8x128xf32>
    tpu.vector_store %arg10[%c0_26, %c0_27], %105 {strides = array<i32>} : memref<8x128xf32, #tpu.memory_space<vmem>>, vector<8x128xf32>,
    return
  }
  func.func @transform_0(%arg0: i32) -> (i32, i32) {
    %c0_i32 = arith.constant 0 : i32
    %c0_i32_0 = arith.constant 0 : i32
    return %arg0, %c0_i32 : i32, i32
  }
  func.func @transform_1(%arg0: i32) -> (i32, i32) {
    %c0_i32 = arith.constant 0 : i32
    %c0_i32_0 = arith.constant 0 : i32
    %c0_i32_1 = arith.constant 0 : i32
    return %c0_i32, %c0_i32_0 : i32, i32
  }
  func.func @transform_2(%arg0: i32) -> (i32, i32) {
    %c0_i32 = arith.constant 0 : i32
    %c0_i32_0 = arith.constant 0 : i32
    %c0_i32_1 = arith.constant 0 : i32
    return %c0_i32, %c0_i32_0 : i32, i32
  }
  func.func @transform_3(%arg0: i32) -> (i32, i32) {
    %c0_i32 = arith.constant 0 : i32
    %c0_i32_0 = arith.constant 0 : i32
    %c0_i32_1 = arith.constant 0 : i32
    return %c0_i32, %c0_i32_0 : i32, i32
  }
  func.func @transform_4(%arg0: i32) -> (i32, i32) {
    %c0_i32 = arith.constant 0 : i32
    %c0_i32_0 = arith.constant 0 : i32
    %c0_i32_1 = arith.constant 0 : i32
    return %c0_i32, %c0_i32_0 : i32, i32
  }
  func.func @transform_5(%arg0: i32) -> (i32, i32) {
    %c0_i32 = arith.constant 0 : i32
    %c0_i32_0 = arith.constant 0 : i32
    %c0_i32_1 = arith.constant 0 : i32
    return %c0_i32, %c0_i32_0 : i32, i32
  }
  func.func @transform_6(%arg0: i32) -> (i32, i32) {
    %c0_i32 = arith.constant 0 : i32
    %c0_i32_0 = arith.constant 0 : i32
    %c0_i32_1 = arith.constant 0 : i32
    return %c0_i32, %c0_i32_0 : i32, i32
  }
  func.func @transform_7(%arg0: i32) -> (i32, i32) {
    %c0_i32 = arith.constant 0 : i32
    %c0_i32_0 = arith.constant 0 : i32
    %c0_i32_1 = arith.constant 0 : i32
    return %c0_i32, %c0_i32_0 : i32, i32
  }
  func.func @transform_8(%arg0: i32) -> (i32, i32) {
    %c0_i32 = arith.constant 0 : i32
    %c0_i32_0 = arith.constant 0 : i32
    %c0_i32_1 = arith.constant 0 : i32
    return %c0_i32, %c0_i32_0 : i32, i32
  }
  func.func @transform_9(%arg0: i32) -> (i32, i32) {
    %c0_i32 = arith.constant 0 : i32
    %c0_i32_0 = arith.constant 0 : i32
    return %arg0, %c0_i32 : i32, i32
  }
}

</mosaic_0001>

<llo_original>
// kernel: tpu_custom_call.1
$region0: #{tpu_custom_call.1}
  #allocation0 [shape = 'u32[]', space=smem, size = 0x4, offset = 0x4, fixed_abs, tag = 'smem constant byte address 0x4 - core index']
  #allocation1 [shape = 'u32[144,128]{1,0:T(1,128)}', space=vmem, size = 0x12000, scoped, tag = 'internal scratch']
  %s0 = inlined_call_operand.hbm [shape: f32[8,32], index: 0, kind: input, shape index: {}]
  %s1 = inlined_call_operand.hbm [shape: f32[5,128], index: 1, kind: input, shape index: {}]
  %s2 = inlined_call_operand.vmem [shape: f32[1,64], index: 2, kind: input, shape index: {}]
  %s3 = inlined_call_operand.hbm [shape: bf16[192,128], index: 3, kind: input, shape index: {}]
  %s4 = inlined_call_operand.vmem [shape: f32[1,128], index: 4, kind: input, shape index: {}]
  %s5 = inlined_call_operand.hbm [shape: bf16[128,128], index: 5, kind: input, shape index: {}]
  %s6 = inlined_call_operand.vmem [shape: f32[1,128], index: 6, kind: input, shape index: {}]
  %s7 = inlined_call_operand.hbm [shape: bf16[128,128], index: 7, kind: input, shape index: {}]
  %s8 = inlined_call_operand.vmem [shape: f32[1,128], index: 8, kind: input, shape index: {}]
  %s9 = inlined_call_operand.hbm [shape: f32[8,128], index: 9, kind: output, shape index: {}]
  %s10 = sld [smem:[#allocation0]]
  $region66: #{tpu_custom_call.1} parent=0
    _
  %s12 = ssub.s32 1, %s10
  %s13 = scalar_select 0, %s12, %s10
  $region1: #{tpu_custom_call.1} parent=0
    #allocation2 [shape = 'u8[4096]{0}', space=vmem, size = 0x1000, scoped, tag = 'input window, operand 0, single buffered']
    #allocation3 [shape = 's32[1]{0}', space=sflag, size = 0x4, scoped, tag = 'scoped memory for tpu_custom_call.1']
    #allocation4 [shape = 's32[1]{0}', space=sflag, size = 0x4, scoped, tag = 'scoped memory for tpu_custom_call.1']
    #allocation5 [shape = 'u8[4096]{0}', space=vmem, size = 0x1000, scoped, tag = 'input window, operand 1, single buffered']
    #allocation6 [shape = 's32[1]{0}', space=sflag, size = 0x4, scoped, tag = 'scoped memory for tpu_custom_call.1']
    #allocation7 [shape = 'u8[49152]{0}', space=vmem, size = 0xc000, scoped, tag = 'input window, operand 3, single buffered']
    #allocation8 [shape = 'u8[32768]{0}', space=vmem, size = 0x8000, scoped, tag = 'input window, operand 5, single buffered']
    #allocation9 [shape = 's32[1]{0}', space=sflag, size = 0x4, scoped, tag = 'scoped memory for tpu_custom_call.1']
    #allocation10 [shape = 'u8[32768]{0}', space=vmem, size = 0x8000, scoped, tag = 'input window, operand 7, single buffered']
    #allocation11 [shape = 'u8[4096]{0}', space=vmem, size = 0x1000, scoped, tag = 'output window, operand 0, single buffered']
    %14 = vsyncpa [#allocation3], 0
    %15 = vsyncpa [#allocation6], 0
    %16 = vsyncpa [#allocation9], 0
    %17 = vsyncpa [#allocation4], 0
    // Predicated region
    $region2: #{tpu_custom_call.1} parent=1 // pred_check
      _
    $region3: #{tpu_custom_call.1} parent=1 // pred_check_branch
      %19 = sbr.rel (0) target = $region5
    $region4: #{tpu_custom_call.1} parent=1 // pred_region
      %s21 = ssub.s32 128, 128
      %22 = vsyncadd [#allocation3], %s21
      %s24 = sshll.u32 [#allocation2], 4
      %s25 = int_to_ptr.vmem [resolvable:$true] %s24
      %27 = dma.hbm_to_vmem [thread:$0]  %s0, 128, %s25, [#allocation3]
    $region5: #{tpu_custom_call.1} parent=1 // pred_fallthru
      _
    // Predicated region
    $region6: #{tpu_custom_call.1} parent=1 // pred_check
      _
    $region7: #{tpu_custom_call.1} parent=1 // pred_check_branch
      %29 = sbr.rel (0) target = $region9
    $region8: #{tpu_custom_call.1} parent=1 // pred_region
      %s31 = ssub.s32 128, 128
      %32 = vsyncadd [#allocation6], %s31
      %s34 = sshll.u32 [#allocation5], 4
      %s35 = int_to_ptr.vmem [resolvable:$true] %s34
      %37 = dma.hbm_to_vmem [thread:$0]  %s1, 128, %s35, [#allocation6]
    $region9: #{tpu_custom_call.1} parent=1 // pred_fallthru
      _
    // Predicated region
    $region10: #{tpu_custom_call.1} parent=1 // pred_check
      _
    $region11: #{tpu_custom_call.1} parent=1 // pred_check_branch
      %39 = sbr.rel (0) target = $region13
    $region12: #{tpu_custom_call.1} parent=1 // pred_region
      _
    $region13: #{tpu_custom_call.1} parent=1 // pred_fallthru
      _
    // Predicated region
    $region14: #{tpu_custom_call.1} parent=1 // pred_check
      _
    $region15: #{tpu_custom_call.1} parent=1 // pred_check_branch
      %41 = sbr.rel (0) target = $region17
    $region16: #{tpu_custom_call.1} parent=1 // pred_region
      %s43 = ssub.s32 1536, 1536
      %44 = vsyncadd [#allocation6], %s43
      %s45 = sshll.u32 [#allocation7], 4
      %s46 = int_to_ptr.vmem [resolvable:$true] %s45
      %51 = dma.hbm_to_vmem [thread:$0]  %s3, 1536, %s46, [#allocation6], 64, 64, 4
    $region17: #{tpu_custom_call.1} parent=1 // pred_fallthru
      _
    // Predicated region
    $region18: #{tpu_custom_call.1} parent=1 // pred_check
      _
    $region19: #{tpu_custom_call.1} parent=1 // pred_check_branch
      %53 = sbr.rel (0) target = $region21
    $region20: #{tpu_custom_call.1} parent=1 // pred_region
      _
    $region21: #{tpu_custom_call.1} parent=1 // pred_fallthru
      _
    // Predicated region
    $region22: #{tpu_custom_call.1} parent=1 // pred_check
      _
    $region23: #{tpu_custom_call.1} parent=1 // pred_check_branch
      %55 = sbr.rel (0) target = $region25
    $region24: #{tpu_custom_call.1} parent=1 // pred_region
      %s57 = ssub.s32 1024, 1024
      %58 = vsyncadd [#allocation9], %s57
      %s59 = sshll.u32 [#allocation8], 4
      %s60 = int_to_ptr.vmem [resolvable:$true] %s59
      %65 = dma.hbm_to_vmem [thread:$0]  %s5, 1024, %s60, [#allocation9], 64, 64, 4
    $region25: #{tpu_custom_call.1} parent=1 // pred_fallthru
      _
    // Predicated region
    $region26: #{tpu_custom_call.1} parent=1 // pred_check
      _
    $region27: #{tpu_custom_call.1} parent=1 // pred_check_branch
      %67 = sbr.rel (0) target = $region29
    $region28: #{tpu_custom_call.1} parent=1 // pred_region
      _
    $region29: #{tpu_custom_call.1} parent=1 // pred_fallthru
      _
    // Predicated region
    $region30: #{tpu_custom_call.1} parent=1 // pred_check
      _
    $region31: #{tpu_custom_call.1} parent=1 // pred_check_branch
      %69 = sbr.rel (0) target = $region33
    $region32: #{tpu_custom_call.1} parent=1 // pred_region
      %s71 = ssub.s32 1024, 1024
      %72 = vsyncadd [#allocation9], %s71
      %s73 = sshll.u32 [#allocation10], 4
      %s74 = int_to_ptr.vmem [resolvable:$true] %s73
      %79 = dma.hbm_to_vmem [thread:$0]  %s7, 1024, %s74, [#allocation9], 64, 64, 4
    $region33: #{tpu_custom_call.1} parent=1 // pred_fallthru
      _
    // Predicated region
    $region34: #{tpu_custom_call.1} parent=1 // pred_check
      _
    $region35: #{tpu_custom_call.1} parent=1 // pred_check_branch
      %81 = sbr.rel (0) target = $region37
    $region36: #{tpu_custom_call.1} parent=1 // pred_region
      _
    $region37: #{tpu_custom_call.1} parent=1 // pred_fallthru
      _
    // Predicated region
    $region38: #{tpu_custom_call.1} parent=1 // pred_check
      _
    $region39: #{tpu_custom_call.1} parent=1 // pred_check_branch
      %83 = sbr.rel (0) target = $region41
    $region40: #{tpu_custom_call.1} parent=1 // pred_region
      %84 = dma.done [#allocation3], 128
    $region41: #{tpu_custom_call.1} parent=1 // pred_fallthru
      _
    // Predicated region
    $region42: #{tpu_custom_call.1} parent=1 // pred_check
      _
    $region43: #{tpu_custom_call.1} parent=1 // pred_check_branch
      %86 = sbr.rel (0) target = $region45
    $region44: #{tpu_custom_call.1} parent=1 // pred_region
      %87 = dma.done [#allocation6], 128
    $region45: #{tpu_custom_call.1} parent=1 // pred_fallthru
      _
    // Predicated region
    $region46: #{tpu_custom_call.1} parent=1 // pred_check
      _
    $region47: #{tpu_custom_call.1} parent=1 // pred_check_branch
      %89 = sbr.rel (0) target = $region49
    $region48: #{tpu_custom_call.1} parent=1 // pred_region
      %90 = dma.done [#allocation6], 1536
    $region49: #{tpu_custom_call.1} parent=1 // pred_fallthru
      _
    // Predicated region
    $region50: #{tpu_custom_call.1} parent=1 // pred_check
      _
    $region51: #{tpu_custom_call.1} parent=1 // pred_check_branch
      %92 = sbr.rel (0) target = $region53
    $region52: #{tpu_custom_call.1} parent=1 // pred_region
      %93 = dma.done [#allocation9], 1024
    $region53: #{tpu_custom_call.1} parent=1 // pred_fallthru
      _
    // Predicated region
    $region54: #{tpu_custom_call.1} parent=1 // pred_check
      _
    $region55: #{tpu_custom_call.1} parent=1 // pred_check_branch
      %95 = sbr.rel (0) target = $region57
    $region56: #{tpu_custom_call.1} parent=1 // pred_region
      %96 = dma.done [#allocation9], 1024
    $region57: #{tpu_custom_call.1} parent=1 // pred_fallthru
      _
    %v98 = vld [vmem:[#allocation2] sm:$0xff]
    %v99 = vlaneseq
    %v100 = vshrl.u32 %v99, 7
    %v101 = vsub.s32 0, %v100
    %v102 = vrot.slane %v98, %v101
    %104 = vbcast.lane.b32.xlu0 %v102, 256
    %v105 = vpop.permute.xlu0 %104
    %s107 = sor.u32 256, 8
    %108 = vbcast.lane.b32.xlu0 %v102, %s107
    %v109 = vpop.permute.xlu0 %108
    %v110 = vlaneseq
    %v111 = vshrl.u32 %v110, 7
    %v112 = vsub.s32 1, %v111
    %v113 = vrot.slane %v98, %v112
    %115 = vbcast.lane.b32.xlu0 %v113, 256
    %v116 = vpop.permute.xlu0 %115
    %s118 = sor.u32 256, 8
    %119 = vbcast.lane.b32.xlu0 %v113, %s118
    %v120 = vpop.permute.xlu0 %119
    %v121 = vlaneseq
    %v122 = vshrl.u32 %v121, 7
    %v123 = vsub.s32 2, %v122
    %v124 = vrot.slane %v98, %v123
    %126 = vbcast.lane.b32.xlu0 %v124, 256
    %v127 = vpop.permute.xlu0 %126
    %s129 = sor.u32 256, 8
    %130 = vbcast.lane.b32.xlu0 %v124, %s129
    %v131 = vpop.permute.xlu0 %130
    %v132 = vlaneseq
    %v133 = vshrl.u32 %v132, 7
    %v134 = vsub.s32 3, %v133
    %v135 = vrot.slane %v98, %v134
    %137 = vbcast.lane.b32.xlu0 %v135, 256
    %v138 = vpop.permute.xlu0 %137
    %s140 = sor.u32 256, 8
    %141 = vbcast.lane.b32.xlu0 %v135, %s140
    %v142 = vpop.permute.xlu0 %141
    %v143 = vlaneseq
    %v144 = vshrl.u32 %v143, 7
    %v145 = vsub.s32 4, %v144
    %v146 = vrot.slane %v98, %v145
    %148 = vbcast.lane.b32.xlu0 %v146, 256
    %v149 = vpop.permute.xlu0 %148
    %s151 = sor.u32 256, 8
    %152 = vbcast.lane.b32.xlu0 %v146, %s151
    %v153 = vpop.permute.xlu0 %152
    %v154 = vlaneseq
    %v155 = vshrl.u32 %v154, 7
    %v156 = vsub.s32 5, %v155
    %v157 = vrot.slane %v98, %v156
    %159 = vbcast.lane.b32.xlu0 %v157, 256
    %v160 = vpop.permute.xlu0 %159
    %s162 = sor.u32 256, 8
    %163 = vbcast.lane.b32.xlu0 %v157, %s162
    %v164 = vpop.permute.xlu0 %163
    %v165 = vlaneseq
    %v166 = vshrl.u32 %v165, 7
    %v167 = vsub.s32 6, %v166
    %v168 = vrot.slane %v98, %v167
    %170 = vbcast.lane.b32.xlu0 %v168, 256
    %v171 = vpop.permute.xlu0 %170
    %s173 = sor.u32 256, 8
    %174 = vbcast.lane.b32.xlu0 %v168, %s173
    %v175 = vpop.permute.xlu0 %174
    %v176 = vlaneseq
    %v177 = vshrl.u32 %v176, 7
    %v178 = vsub.s32 7, %v177
    %v179 = vrot.slane %v98, %v178
    %181 = vbcast.lane.b32.xlu0 %v179, 256
    %v182 = vpop.permute.xlu0 %181
    %s184 = sor.u32 256, 8
    %185 = vbcast.lane.b32.xlu0 %v179, %s184
    %v186 = vpop.permute.xlu0 %185
    %s188 = sor.u32 256, 16
    %189 = vbcast.lane.b32.xlu0 %v102, %s188
    %v190 = vpop.permute.xlu0 %189
    %s192 = sor.u32 256, 24
    %193 = vbcast.lane.b32.xlu0 %v102, %s192
    %v194 = vpop.permute.xlu0 %193
    %s196 = sor.u32 256, 16
    %197 = vbcast.lane.b32.xlu0 %v113, %s196
    %v198 = vpop.permute.xlu0 %197
    %s200 = sor.u32 256, 24
    %201 = vbcast.lane.b32.xlu0 %v113, %s200
    %v202 = vpop.permute.xlu0 %201
    %s204 = sor.u32 256, 16
    %205 = vbcast.lane.b32.xlu0 %v124, %s204
    %v206 = vpop.permute.xlu0 %205
    %s208 = sor.u32 256, 24
    %209 = vbcast.lane.b32.xlu0 %v124, %s208
    %v210 = vpop.permute.xlu0 %209
    %s212 = sor.u32 256, 16
    %213 = vbcast.lane.b32.xlu0 %v135, %s212
    %v214 = vpop.permute.xlu0 %213
    %s216 = sor.u32 256, 24
    %217 = vbcast.lane.b32.xlu0 %v135, %s216
    %v218 = vpop.permute.xlu0 %217
    %s220 = sor.u32 256, 16
    %221 = vbcast.lane.b32.xlu0 %v146, %s220
    %v222 = vpop.permute.xlu0 %221
    %s224 = sor.u32 256, 24
    %225 = vbcast.lane.b32.xlu0 %v146, %s224
    %v226 = vpop.permute.xlu0 %225
    %s228 = sor.u32 256, 16
    %229 = vbcast.lane.b32.xlu0 %v157, %s228
    %v230 = vpop.permute.xlu0 %229
    %s232 = sor.u32 256, 24
    %233 = vbcast.lane.b32.xlu0 %v157, %s232
    %v234 = vpop.permute.xlu0 %233
    %s236 = sor.u32 256, 16
    %237 = vbcast.lane.b32.xlu0 %v168, %s236
    %v238 = vpop.permute.xlu0 %237
    %s240 = sor.u32 256, 24
    %241 = vbcast.lane.b32.xlu0 %v168, %s240
    %v242 = vpop.permute.xlu0 %241
    %s244 = sor.u32 256, 16
    %245 = vbcast.lane.b32.xlu0 %v179, %s244
    %v246 = vpop.permute.xlu0 %245
    %s248 = sor.u32 256, 24
    %249 = vbcast.lane.b32.xlu0 %v179, %s248
    %v250 = vpop.permute.xlu0 %249
    %vm251 = vcmask 523264
    %v252 = vsel %vm251, %v105, %v190
    %v253 = vsel %vm251, %v109, %v194
    %v254 = vsel %vm251, %v116, %v198
    %v255 = vsel %vm251, %v120, %v202
    %v256 = vsel %vm251, %v127, %v206
    %v257 = vsel %vm251, %v131, %v210
    %v258 = vsel %vm251, %v138, %v214
    %v259 = vsel %vm251, %v142, %v218
    %v260 = vsel %vm251, %v149, %v222
    %v261 = vsel %vm251, %v153, %v226
    %v262 = vsel %vm251, %v160, %v230
    %v263 = vsel %vm251, %v164, %v234
    %v264 = vsel %vm251, %v171, %v238
    %v265 = vsel %vm251, %v175, %v242
    %v266 = vsel %vm251, %v182, %v246
    %v267 = vsel %vm251, %v186, %v250
    %s269 = sor.u32 256, 1
    %270 = vbcast.lane.b32.xlu0 %v102, %s269
    %v271 = vpop.permute.xlu0 %270
    %s273 = sor.u32 256, 9
    %274 = vbcast.lane.b32.xlu0 %v102, %s273
    %v275 = vpop.permute.xlu0 %274
    %s277 = sor.u32 256, 1
    %278 = vbcast.lane.b32.xlu0 %v113, %s277
    %v279 = vpop.permute.xlu0 %278
    %s281 = sor.u32 256, 9
    %282 = vbcast.lane.b32.xlu0 %v113, %s281
    %v283 = vpop.permute.xlu0 %282
    %s285 = sor.u32 256, 1
    %286 = vbcast.lane.b32.xlu0 %v124, %s285
    %v287 = vpop.permute.xlu0 %286
    %s289 = sor.u32 256, 9
    %290 = vbcast.lane.b32.xlu0 %v124, %s289
    %v291 = vpop.permute.xlu0 %290
    %s293 = sor.u32 256, 1
    %294 = vbcast.lane.b32.xlu0 %v135, %s293
    %v295 = vpop.permute.xlu0 %294
    %s297 = sor.u32 256, 9
    %298 = vbcast.lane.b32.xlu0 %v135, %s297
    %v299 = vpop.permute.xlu0 %298
    %s301 = sor.u32 256, 1
    %302 = vbcast.lane.b32.xlu0 %v146, %s301
    %v303 = vpop.permute.xlu0 %302
    %s305 = sor.u32 256, 9
    %306 = vbcast.lane.b32.xlu0 %v146, %s305
    %v307 = vpop.permute.xlu0 %306
    %s309 = sor.u32 256, 1
    %310 = vbcast.lane.b32.xlu0 %v157, %s309
    %v311 = vpop.permute.xlu0 %310
    %s313 = sor.u32 256, 9
    %314 = vbcast.lane.b32.xlu0 %v157, %s313
    %v315 = vpop.permute.xlu0 %314
    %s317 = sor.u32 256, 1
    %318 = vbcast.lane.b32.xlu0 %v168, %s317
    %v319 = vpop.permute.xlu0 %318
    %s321 = sor.u32 256, 9
    %322 = vbcast.lane.b32.xlu0 %v168, %s321
    %v323 = vpop.permute.xlu0 %322
    %s325 = sor.u32 256, 1
    %326 = vbcast.lane.b32.xlu0 %v179, %s325
    %v327 = vpop.permute.xlu0 %326
    %s329 = sor.u32 256, 9
    %330 = vbcast.lane.b32.xlu0 %v179, %s329
    %v331 = vpop.permute.xlu0 %330
    %v332 = vsel %vm251, %v190, %v271
    %v333 = vsel %vm251, %v194, %v275
    %v334 = vsel %vm251, %v198, %v279
    %v335 = vsel %vm251, %v202, %v283
    %v336 = vsel %vm251, %v206, %v287
    %v337 = vsel %vm251, %v210, %v291
    %v338 = vsel %vm251, %v214, %v295
    %v339 = vsel %vm251, %v218, %v299
    %v340 = vsel %vm251, %v222, %v303
    %v341 = vsel %vm251, %v226, %v307
    %v342 = vsel %vm251, %v230, %v311
    %v343 = vsel %vm251, %v234, %v315
    %v344 = vsel %vm251, %v238, %v319
    %v345 = vsel %vm251, %v242, %v323
    %v346 = vsel %vm251, %v246, %v327
    %v347 = vsel %vm251, %v250, %v331
    %v348 = vld [vmem:[#allocation5] sm:$0x1f]
    %v349 = vlaneseq
    %v350 = vshrl.u32 %v349, 7
    %v351 = vsub.s32 0, %v350
    %v352 = vrot.slane %v348, %v351
    %v353 = vmul.f32 %v252, %v352
    %v354 = vmul.f32 %v253, %v352
    %v355 = vmul.f32 %v254, %v352
    %v356 = vmul.f32 %v255, %v352
    %v357 = vmul.f32 %v256, %v352
    %v358 = vmul.f32 %v257, %v352
    %v359 = vmul.f32 %v258, %v352
    %v360 = vmul.f32 %v259, %v352
    %v361 = vmul.f32 %v260, %v352
    %v362 = vmul.f32 %v261, %v352
    %v363 = vmul.f32 %v262, %v352
    %v364 = vmul.f32 %v263, %v352
    %v365 = vmul.f32 %v264, %v352
    %v366 = vmul.f32 %v265, %v352
    %v367 = vmul.f32 %v266, %v352
    %v368 = vmul.f32 %v267, %v352
    %v369 = vadd.f32 %v353, 0.0
    %v370 = vadd.f32 %v354, 0.0
    %v371 = vadd.f32 %v355, 0.0
    %v372 = vadd.f32 %v356, 0.0
    %v373 = vadd.f32 %v357, 0.0
    %v374 = vadd.f32 %v358, 0.0
    %v375 = vadd.f32 %v359, 0.0
    %v376 = vadd.f32 %v360, 0.0
    %v377 = vadd.f32 %v361, 0.0
    %v378 = vadd.f32 %v362, 0.0
    %v379 = vadd.f32 %v363, 0.0
    %v380 = vadd.f32 %v364, 0.0
    %v381 = vadd.f32 %v365, 0.0
    %v382 = vadd.f32 %v366, 0.0
    %v383 = vadd.f32 %v367, 0.0
    %v384 = vadd.f32 %v368, 0.0
    %v385 = vlaneseq
    %v386 = vshrl.u32 %v385, 7
    %v387 = vsub.s32 1, %v386
    %v388 = vrot.slane %v348, %v387
    %v389 = vmul.f32 %v332, %v388
    %v390 = vmul.f32 %v333, %v388
    %v391 = vmul.f32 %v334, %v388
    %v392 = vmul.f32 %v335, %v388
    %v393 = vmul.f32 %v336, %v388
    %v394 = vmul.f32 %v337, %v388
    %v395 = vmul.f32 %v338, %v388
    %v396 = vmul.f32 %v339, %v388
    %v397 = vmul.f32 %v340, %v388
    %v398 = vmul.f32 %v341, %v388
    %v399 = vmul.f32 %v342, %v388
    %v400 = vmul.f32 %v343, %v388
    %v401 = vmul.f32 %v344, %v388
    %v402 = vmul.f32 %v345, %v388
    %v403 = vmul.f32 %v346, %v388
    %v404 = vmul.f32 %v347, %v388
    %v405 = vadd.f32 %v369, %v389
    %v406 = vadd.f32 %v370, %v390
    %v407 = vadd.f32 %v371, %v391
    %v408 = vadd.f32 %v372, %v392
    %v409 = vadd.f32 %v373, %v393
    %v410 = vadd.f32 %v374, %v394
    %v411 = vadd.f32 %v375, %v395
    %v412 = vadd.f32 %v376, %v396
    %v413 = vadd.f32 %v377, %v397
    %v414 = vadd.f32 %v378, %v398
    %v415 = vadd.f32 %v379, %v399
    %v416 = vadd.f32 %v380, %v400
    %v417 = vadd.f32 %v381, %v401
    %v418 = vadd.f32 %v382, %v402
    %v419 = vadd.f32 %v383, %v403
    %v420 = vadd.f32 %v384, %v404
    %v421 = vlaneseq
    %v422 = vshrl.u32 %v421, 7
    %v423 = vsub.s32 2, %v422
    %v424 = vrot.slane %v348, %v423
    %v425 = vmul.f32 %v252, %v424
    %v426 = vmul.f32 %v253, %v424
    %v427 = vmul.f32 %v254, %v424
    %v428 = vmul.f32 %v255, %v424
    %v429 = vmul.f32 %v256, %v424
    %v430 = vmul.f32 %v257, %v424
    %v431 = vmul.f32 %v258, %v424
    %v432 = vmul.f32 %v259, %v424
    %v433 = vmul.f32 %v260, %v424
    %v434 = vmul.f32 %v261, %v424
    %v435 = vmul.f32 %v262, %v424
    %v436 = vmul.f32 %v263, %v424
    %v437 = vmul.f32 %v264, %v424
    %v438 = vmul.f32 %v265, %v424
    %v439 = vmul.f32 %v266, %v424
    %v440 = vmul.f32 %v267, %v424
    %vm457 = vcmask 1046528
    %v458 = vrot.slane %v425, 1
    %v459 = vrot.slane %v426, 1
    %v460 = vsel %vm457, %v458, %v459
    %v461 = vrot.slane %v427, 1
    %v462 = vrot.slane %v428, 1
    %v463 = vsel %vm457, %v461, %v462
    %v464 = vrot.slane %v429, 1
    %v465 = vrot.slane %v430, 1
    %v466 = vsel %vm457, %v464, %v465
    %v467 = vrot.slane %v431, 1
    %v468 = vrot.slane %v432, 1
    %v469 = vsel %vm457, %v467, %v468
    %v470 = vrot.slane %v433, 1
    %v471 = vrot.slane %v434, 1
    %v472 = vsel %vm457, %v470, %v471
    %v473 = vrot.slane %v435, 1
    %v474 = vrot.slane %v436, 1
    %v475 = vsel %vm457, %v473, %v474
    %v476 = vrot.slane %v437, 1
    %v477 = vrot.slane %v438, 1
    %v478 = vsel %vm457, %v476, %v477
    %v479 = vrot.slane %v439, 1
    %v480 = vrot.slane %v440, 1
    %v481 = vsel %vm457, %v479, %v480
    %v498 = vadd.f32 %v405, %v460
    %v499 = vadd.f32 %v406, %v459
    %v500 = vadd.f32 %v407, %v463
    %v501 = vadd.f32 %v408, %v462
    %v502 = vadd.f32 %v409, %v466
    %v503 = vadd.f32 %v410, %v465
    %v504 = vadd.f32 %v411, %v469
    %v505 = vadd.f32 %v412, %v468
    %v506 = vadd.f32 %v413, %v472
    %v507 = vadd.f32 %v414, %v471
    %v508 = vadd.f32 %v415, %v475
    %v509 = vadd.f32 %v416, %v474
    %v510 = vadd.f32 %v417, %v478
    %v511 = vadd.f32 %v418, %v477
    %v512 = vadd.f32 %v419, %v481
    %v513 = vadd.f32 %v420, %v480
    %v514 = vlaneseq
    %v515 = vshrl.u32 %v514, 7
    %v516 = vsub.s32 3, %v515
    %v517 = vrot.slane %v348, %v516
    %v518 = vmul.f32 %v332, %v517
    %v519 = vmul.f32 %v333, %v517
    %v520 = vmul.f32 %v334, %v517
    %v521 = vmul.f32 %v335, %v517
    %v522 = vmul.f32 %v336, %v517
    %v523 = vmul.f32 %v337, %v517
    %v524 = vmul.f32 %v338, %v517
    %v525 = vmul.f32 %v339, %v517
    %v526 = vmul.f32 %v340, %v517
    %v527 = vmul.f32 %v341, %v517
    %v528 = vmul.f32 %v342, %v517
    %v529 = vmul.f32 %v343, %v517
    %v530 = vmul.f32 %v344, %v517
    %v531 = vmul.f32 %v345, %v517
    %v532 = vmul.f32 %v346, %v517
    %v533 = vmul.f32 %v347, %v517
    %v550 = vrot.slane %v518, 1
    %v551 = vrot.slane %v519, 1
    %v552 = vsel %vm457, %v550, %v551
    %v553 = vrot.slane %v520, 1
    %v554 = vrot.slane %v521, 1
    %v555 = vsel %vm457, %v553, %v554
    %v556 = vrot.slane %v522, 1
    %v557 = vrot.slane %v523, 1
    %v558 = vsel %vm457, %v556, %v557
    %v559 = vrot.slane %v524, 1
    %v560 = vrot.slane %v525, 1
    %v561 = vsel %vm457, %v559, %v560
    %v562 = vrot.slane %v526, 1
    %v563 = vrot.slane %v527, 1
    %v564 = vsel %vm457, %v562, %v563
    %v565 = vrot.slane %v528, 1
    %v566 = vrot.slane %v529, 1
    %v567 = vsel %vm457, %v565, %v566
    %v568 = vrot.slane %v530, 1
    %v569 = vrot.slane %v531, 1
    %v570 = vsel %vm457, %v568, %v569
    %v571 = vrot.slane %v532, 1
    %v572 = vrot.slane %v533, 1
    %v573 = vsel %vm457, %v571, %v572
    %v590 = vadd.f32 %v498, %v552
    %v591 = vadd.f32 %v499, %v551
    %v592 = vadd.f32 %v500, %v555
    %v593 = vadd.f32 %v501, %v554
    %v594 = vadd.f32 %v502, %v558
    %v595 = vadd.f32 %v503, %v557
    %v596 = vadd.f32 %v504, %v561
    %v597 = vadd.f32 %v505, %v560
    %v598 = vadd.f32 %v506, %v564
    %v599 = vadd.f32 %v507, %v563
    %v600 = vadd.f32 %v508, %v567
    %v601 = vadd.f32 %v509, %v566
    %v602 = vadd.f32 %v510, %v570
    %v603 = vadd.f32 %v511, %v569
    %v604 = vadd.f32 %v512, %v573
    %v605 = vadd.f32 %v513, %v572
    %v606 = vlaneseq
    %v607 = vshrl.u32 %v606, 7
    %v608 = vsub.s32 4, %v607
    %v609 = vrot.slane %v348, %v608
    %v610 = vmul.f32 %v252, %v609
    %v611 = vmul.f32 %v253, %v609
    %v612 = vmul.f32 %v254, %v609
    %v613 = vmul.f32 %v255, %v609
    %v614 = vmul.f32 %v256, %v609
    %v615 = vmul.f32 %v257, %v609
    %v616 = vmul.f32 %v258, %v609
    %v617 = vmul.f32 %v259, %v609
    %v618 = vmul.f32 %v260, %v609
    %v619 = vmul.f32 %v261, %v609
    %v620 = vmul.f32 %v262, %v609
    %v621 = vmul.f32 %v263, %v609
    %v622 = vmul.f32 %v264, %v609
    %v623 = vmul.f32 %v265, %v609
    %v624 = vmul.f32 %v266, %v609
    %v625 = vmul.f32 %v267, %v609
    %vm642 = vcmask 1045504
    %v643 = vrot.slane %v610, 2
    %v644 = vrot.slane %v611, 2
    %v645 = vsel %vm642, %v643, %v644
    %v646 = vrot.slane %v612, 2
    %v647 = vrot.slane %v613, 2
    %v648 = vsel %vm642, %v646, %v647
    %v649 = vrot.slane %v614, 2
    %v650 = vrot.slane %v615, 2
    %v651 = vsel %vm642, %v649, %v650
    %v652 = vrot.slane %v616, 2
    %v653 = vrot.slane %v617, 2
    %v654 = vsel %vm642, %v652, %v653
    %v655 = vrot.slane %v618, 2
    %v656 = vrot.slane %v619, 2
    %v657 = vsel %vm642, %v655, %v656
    %v658 = vrot.slane %v620, 2
    %v659 = vrot.slane %v621, 2
    %v660 = vsel %vm642, %v658, %v659
    %v661 = vrot.slane %v622, 2
    %v662 = vrot.slane %v623, 2
    %v663 = vsel %vm642, %v661, %v662
    %v664 = vrot.slane %v624, 2
    %v665 = vrot.slane %v625, 2
    %v666 = vsel %vm642, %v664, %v665
    %v683 = vadd.f32 %v590, %v645
    %v684 = vadd.f32 %v591, %v644
    %v685 = vadd.f32 %v592, %v648
    %v686 = vadd.f32 %v593, %v647
    %v687 = vadd.f32 %v594, %v651
    %v688 = vadd.f32 %v595, %v650
    %v689 = vadd.f32 %v596, %v654
    %v690 = vadd.f32 %v597, %v653
    %v691 = vadd.f32 %v598, %v657
    %v692 = vadd.f32 %v599, %v656
    %v693 = vadd.f32 %v600, %v660
    %v694 = vadd.f32 %v601, %v659
    %v695 = vadd.f32 %v602, %v663
    %v696 = vadd.f32 %v603, %v662
    %v697 = vadd.f32 %v604, %v666
    %v698 = vadd.f32 %v605, %v665
    %715 = vrot.lane.b32.xlu0 %v683, 64
    %v716 = vpop.permute.xlu0 %715
    %717 = vrot.lane.b32.xlu0 %v684, 64
    %v718 = vpop.permute.xlu0 %717
    %719 = vrot.lane.b32.xlu0 %v685, 64
    %v720 = vpop.permute.xlu0 %719
    %721 = vrot.lane.b32.xlu0 %v686, 64
    %v722 = vpop.permute.xlu0 %721
    %723 = vrot.lane.b32.xlu0 %v687, 64
    %v724 = vpop.permute.xlu0 %723
    %725 = vrot.lane.b32.xlu0 %v688, 64
    %v726 = vpop.permute.xlu0 %725
    %727 = vrot.lane.b32.xlu0 %v689, 64
    %v728 = vpop.permute.xlu0 %727
    %729 = vrot.lane.b32.xlu0 %v690, 64
    %v730 = vpop.permute.xlu0 %729
    %731 = vrot.lane.b32.xlu0 %v691, 64
    %v732 = vpop.permute.xlu0 %731
    %733 = vrot.lane.b32.xlu0 %v692, 64
    %v734 = vpop.permute.xlu0 %733
    %735 = vrot.lane.b32.xlu0 %v693, 64
    %v736 = vpop.permute.xlu0 %735
    %737 = vrot.lane.b32.xlu0 %v694, 64
    %v738 = vpop.permute.xlu0 %737
    %739 = vrot.lane.b32.xlu0 %v695, 64
    %v740 = vpop.permute.xlu0 %739
    %741 = vrot.lane.b32.xlu0 %v696, 64
    %v742 = vpop.permute.xlu0 %741
    %743 = vrot.lane.b32.xlu0 %v697, 64
    %v744 = vpop.permute.xlu0 %743
    %745 = vrot.lane.b32.xlu0 %v698, 64
    %v746 = vpop.permute.xlu0 %745
    %v763 = vmax.f32 %v683, %v716
    %v764 = vmax.f32 %v684, %v718
    %v765 = vmax.f32 %v685, %v720
    %v766 = vmax.f32 %v686, %v722
    %v767 = vmax.f32 %v687, %v724
    %v768 = vmax.f32 %v688, %v726
    %v769 = vmax.f32 %v689, %v728
    %v770 = vmax.f32 %v690, %v730
    %v771 = vmax.f32 %v691, %v732
    %v772 = vmax.f32 %v692, %v734
    %v773 = vmax.f32 %v693, %v736
    %v774 = vmax.f32 %v694, %v738
    %v775 = vmax.f32 %v695, %v740
    %v776 = vmax.f32 %v696, %v742
    %v777 = vmax.f32 %v697, %v744
    %v778 = vmax.f32 %v698, %v746
    %v779 = vld [vmem:[%s2] sm:$0x1]
    %v781 = vlaneseq
    %v782 = vshrl.u32 %v781, 7
    %v783 = vsub.s32 0, %v782
    %v784 = vrot.slane %v779, %v783
    %v786 = vadd.f32 %v763, %v784
    %v787 = vadd.f32 %v764, %v784
    %v788 = vadd.f32 %v765, %v784
    %v789 = vadd.f32 %v766, %v784
    %v790 = vadd.f32 %v767, %v784
    %v791 = vadd.f32 %v768, %v784
    %v792 = vadd.f32 %v769, %v784
    %v793 = vadd.f32 %v770, %v784
    %v794 = vadd.f32 %v771, %v784
    %v795 = vadd.f32 %v772, %v784
    %v796 = vadd.f32 %v773, %v784
    %v797 = vadd.f32 %v774, %v784
    %v798 = vadd.f32 %v775, %v784
    %v799 = vadd.f32 %v776, %v784
    %v800 = vadd.f32 %v777, %v784
    %v801 = vadd.f32 %v778, %v784
    %v802 = vmax.f32 %v786, 0.0
    %v803 = vmax.f32 %v787, 0.0
    %v804 = vmax.f32 %v788, 0.0
    %v805 = vmax.f32 %v789, 0.0
    %v806 = vmax.f32 %v790, 0.0
    %v807 = vmax.f32 %v791, 0.0
    %v808 = vmax.f32 %v792, 0.0
    %v809 = vmax.f32 %v793, 0.0
    %v810 = vmax.f32 %v794, 0.0
    %v811 = vmax.f32 %v795, 0.0
    %v812 = vmax.f32 %v796, 0.0
    %v813 = vmax.f32 %v797, 0.0
    %v814 = vmax.f32 %v798, 0.0
    %v815 = vmax.f32 %v799, 0.0
    %v816 = vmax.f32 %v800, 0.0
    %v817 = vmax.f32 %v801, 0.0
    %v818 = vpack.c.bf16 %v803, %v802
    %v819 = vpack.c.bf16 %v805, %v804
    %v820 = vpack.c.bf16 %v807, %v806
    %v821 = vpack.c.bf16 %v809, %v808
    %v822 = vpack.c.bf16 %v811, %v810
    %v823 = vpack.c.bf16 %v813, %v812
    %v824 = vpack.c.bf16 %v815, %v814
    %v825 = vpack.c.bf16 %v817, %v816
    %v828 = vsel %vm457, %v818, 0
    %v830 = vsel %vm457, %v819, 0
    %v832 = vsel %vm457, %v820, 0
    %v834 = vsel %vm457, %v821, 0
    %v836 = vsel %vm457, %v822, 0
    %v838 = vsel %vm457, %v823, 0
    %v840 = vsel %vm457, %v824, 0
    %v842 = vsel %vm457, %v825, 0
    %vm843 = vsmask.f32 7424
    %v844 = vshrl.u32 %v828, 16
    %v846 = vshll.u32 %v828, 16
    %v848 = vrot.slane %v846, 1
    %v849 = vor.u32 %v844, %v848
    %v850 = vshll.u32 0, 16
    %v852 = vrot.slane %v850, 1
    %v853 = vsel %vm843, %v849, %v852
    %v854 = vshrl.u32 %v830, 16
    %v856 = vshll.u32 %v830, 16
    %v858 = vrot.slane %v856, 1
    %v859 = vor.u32 %v854, %v858
    %v860 = vsel %vm843, %v859, %v852
    %v861 = vshrl.u32 %v832, 16
    %v863 = vshll.u32 %v832, 16
    %v865 = vrot.slane %v863, 1
    %v866 = vor.u32 %v861, %v865
    %v867 = vsel %vm843, %v866, %v852
    %v868 = vshrl.u32 %v834, 16
    %v870 = vshll.u32 %v834, 16
    %v872 = vrot.slane %v870, 1
    %v873 = vor.u32 %v868, %v872
    %v874 = vsel %vm843, %v873, %v852
    %v875 = vshrl.u32 %v836, 16
    %v877 = vshll.u32 %v836, 16
    %v879 = vrot.slane %v877, 1
    %v880 = vor.u32 %v875, %v879
    %v881 = vsel %vm843, %v880, %v852
    %v882 = vshrl.u32 %v838, 16
    %v884 = vshll.u32 %v838, 16
    %v886 = vrot.slane %v884, 1
    %v887 = vor.u32 %v882, %v886
    %v888 = vsel %vm843, %v887, %v852
    %v889 = vshrl.u32 %v840, 16
    %v891 = vshll.u32 %v840, 16
    %v893 = vrot.slane %v891, 1
    %v894 = vor.u32 %v889, %v893
    %v895 = vsel %vm843, %v894, %v852
    %v896 = vshrl.u32 %v842, 16
    %v898 = vshll.u32 %v842, 16
    %v900 = vrot.slane %v898, 1
    %v901 = vor.u32 %v896, %v900
    %v902 = vsel %vm843, %v901, %v852
    %903 = vrot.lane.b32.xlu0 %v853, 64
    %v904 = vpop.permute.xlu0 %903
    %905 = vrot.lane.b32.xlu0 %v860, 64
    %v906 = vpop.permute.xlu0 %905
    %907 = vrot.lane.b32.xlu0 %v867, 64
    %v908 = vpop.permute.xlu0 %907
    %909 = vrot.lane.b32.xlu0 %v874, 64
    %v910 = vpop.permute.xlu0 %909
    %911 = vrot.lane.b32.xlu0 %v881, 64
    %v912 = vpop.permute.xlu0 %911
    %913 = vrot.lane.b32.xlu0 %v888, 64
    %v914 = vpop.permute.xlu0 %913
    %915 = vrot.lane.b32.xlu0 %v895, 64
    %v916 = vpop.permute.xlu0 %915
    %917 = vrot.lane.b32.xlu0 %v902, 64
    %v918 = vpop.permute.xlu0 %917
    %vm928 = vcmask 1046528
    %v929 = vrot.slane %v828, 1
    %v930 = vrot.slane 0, 1
    %v931 = vsel %vm928, %v929, %v930
    %v932 = vrot.slane %v830, 1
    %v933 = vsel %vm928, %v932, %v930
    %v934 = vrot.slane %v832, 1
    %v935 = vsel %vm928, %v934, %v930
    %v936 = vrot.slane %v834, 1
    %v937 = vsel %vm928, %v936, %v930
    %v938 = vrot.slane %v836, 1
    %v939 = vsel %vm928, %v938, %v930
    %v940 = vrot.slane %v838, 1
    %v941 = vsel %vm928, %v940, %v930
    %v942 = vrot.slane %v840, 1
    %v943 = vsel %vm928, %v942, %v930
    %v944 = vrot.slane %v842, 1
    %v945 = vsel %vm928, %v944, %v930
    %v947 = vsel %vm251, %v828, %v904
    %v950 = vsel %vm251, %v830, %v906
    %v953 = vsel %vm251, %v832, %v908
    %v956 = vsel %vm251, %v834, %v910
    %v959 = vsel %vm251, %v836, %v912
    %v962 = vsel %vm251, %v838, %v914
    %v965 = vsel %vm251, %v840, %v916
    %v968 = vsel %vm251, %v842, %v918
    %v970 = vld [vmem:[#allocation7] sm:$0xf]
    %v971 = vld [vmem:[#allocation7 + $0x4] sm:$0xf]
    %v972 = vld [vmem:[#allocation7 + $0x8] sm:$0xf]
    %v973 = vld [vmem:[#allocation7 + $0xc] sm:$0xf]
    %v974 = vld [vmem:[#allocation7 + $0x10] sm:$0xf]
    %v975 = vld [vmem:[#allocation7 + $0x14] sm:$0xf]
    %v976 = vld [vmem:[#allocation7 + $0x18] sm:$0xf]
    %v977 = vld [vmem:[#allocation7 + $0x1c] sm:$0xf]
    %v978 = vld [vmem:[#allocation7 + $0x20] sm:$0xf]
    %v979 = vld [vmem:[#allocation7 + $0x24] sm:$0xf]
    %v980 = vld [vmem:[#allocation7 + $0x28] sm:$0xf]
    %v981 = vld [vmem:[#allocation7 + $0x2c] sm:$0xf]
    %v982 = vld [vmem:[#allocation7 + $0x30] sm:$0xf]
    %v983 = vld [vmem:[#allocation7 + $0x34] sm:$0xf]
    %v984 = vld [vmem:[#allocation7 + $0x38] sm:$0xf]
    %v985 = vld [vmem:[#allocation7 + $0x3c] sm:$0xf]
    %v986 = vld [vmem:[#allocation7 + $0x40] sm:$0xf]
    %v987 = vld [vmem:[#allocation7 + $0x44] sm:$0xf]
    %v988 = vld [vmem:[#allocation7 + $0x48] sm:$0xf]
    %v989 = vld [vmem:[#allocation7 + $0x4c] sm:$0xf]
    %v990 = vld [vmem:[#allocation7 + $0x50] sm:$0xf]
    %v991 = vld [vmem:[#allocation7 + $0x54] sm:$0xf]
    %v992 = vld [vmem:[#allocation7 + $0x58] sm:$0xf]
    %v993 = vld [vmem:[#allocation7 + $0x5c] sm:$0xf]
    %v1018 = vunpack.c.l.b16 %v970
    %v1019 = vunpack.c.l.b16 %v971
    %v1020 = vunpack.c.l.b16 %v972
    %v1021 = vunpack.c.l.b16 %v973
    %v1022 = vunpack.c.l.b16 %v974
    %v1023 = vunpack.c.l.b16 %v975
    %v1024 = vunpack.c.l.b16 %v976
    %v1025 = vunpack.c.l.b16 %v977
    %v1026 = vunpack.c.l.b16 %v978
    %v1027 = vunpack.c.l.b16 %v979
    %v1028 = vunpack.c.l.b16 %v980
    %v1029 = vunpack.c.l.b16 %v981
    %v1030 = vunpack.c.l.b16 %v982
    %v1031 = vunpack.c.l.b16 %v983
    %v1032 = vunpack.c.l.b16 %v984
    %v1033 = vunpack.c.l.b16 %v985
    %v1034 = vunpack.c.l.b16 %v986
    %v1035 = vunpack.c.l.b16 %v987
    %v1036 = vunpack.c.l.b16 %v988
    %v1037 = vunpack.c.l.b16 %v989
    %v1038 = vunpack.c.l.b16 %v990
    %v1039 = vunpack.c.l.b16 %v991
    %v1040 = vunpack.c.l.b16 %v992
    %v1041 = vunpack.c.l.b16 %v993
    %v1042 = vpack.c.b16 %v1019, %v1018
    %v1043 = vpack.c.b16 %v1021, %v1020
    %v1044 = vpack.c.b16 %v1023, %v1022
    %v1045 = vpack.c.b16 %v1025, %v1024
    %v1046 = vpack.c.b16 %v1027, %v1026
    %v1047 = vpack.c.b16 %v1029, %v1028
    %v1048 = vpack.c.b16 %v1031, %v1030
    %v1049 = vpack.c.b16 %v1033, %v1032
    %v1050 = vpack.c.b16 %v1035, %v1034
    %v1051 = vpack.c.b16 %v1037, %v1036
    %v1052 = vpack.c.b16 %v1039, %v1038
    %v1053 = vpack.c.b16 %v1041, %v1040
    %v1067 = vsel %vm251, %v931, 0
    %v1070 = vsel %vm251, %v933, 0
    %v1073 = vsel %vm251, %v935, 0
    %v1076 = vsel %vm251, %v937, 0
    %v1079 = vsel %vm251, %v939, 0
    %v1082 = vsel %vm251, %v941, 0
    %v1085 = vsel %vm251, %v943, 0
    %v1088 = vsel %vm251, %v945, 0
    %1090 = vmatprep.subr.bf16.mxu0 0
    %1091 = vmatpush1.bf16.msra.mxu0 %v1042
    %1092 = vmatprep.subr.bf16.mxu0 0
    %1093 = vmatpush1.bf16.msra.mxu0 %v1043
    %1094 = vmatprep.subr.bf16.mxu0 0
    %1095 = vmatpush1.bf16.msra.mxu0 %v1044
    %1096 = vmatprep.subr.bf16.mxu0 0
    %1097 = vmatpush1.bf16.msra.mxu0 %v1045
    %1098 = vmatprep.subr.bf16.mxu0 0
    %1099 = vmatpush1.bf16.msra.mxu0 %v1046
    %1100 = vmatprep.subr.bf16.mxu0 0
    %1101 = vmatpush1.bf16.msra.mxu0 %v1047
    %1102 = vmatprep.subr.bf16.mxu0 0
    %1103 = vmatpush1.bf16.msra.mxu0 %v1048
    %1104 = vmatprep.subr.bf16.mxu0 0
    %1105 = vmatpush1.bf16.msra.mxu0 %v1049
    %1106 = vmatprep.subr.bf16.mxu0 0
    %1107 = vmatpush1.bf16.msra.mxu0 %v1050
    %1108 = vmatprep.subr.bf16.mxu0 0
    %1109 = vmatpush1.bf16.msra.mxu0 %v1051
    %1110 = vmatprep.subr.bf16.mxu0 0
    %1111 = vmatpush1.bf16.msra.mxu0 %v1052
    %1112 = vmatprep.subr.bf16.mxu0 0
    %1113 = vmatpush1.bf16.msra.mxu0 %v1053
    %1114 = vmatprep.subr.bf16.mxu0 0
    %1115 = vmatpush1.bf16.msra.mxu0 0
    %1116 = vmatprep.subr.bf16.mxu0 0
    %1117 = vmatpush1.bf16.msra.mxu0 0
    %1118 = vmatprep.subr.bf16.mxu0 0
    %1119 = vmatpush1.bf16.msra.mxu0 0
    %1120 = vmatprep.subr.bf16.mxu0 0
    %1121 = vmatpush1.bf16.msra.mxu0 0
    %1122 = vmatprep.mubr.bf16.mxu0 %v1067
    %1123 = vmatmul.mubr.bf16.gmra.mrb[0].mxu0 %v947
    %v1124 = vpop.f32.mrb[0].mxu0
    %v1125 = vadd.f32 0.0, %v1124
    %v1126 = vpop.f32.mrb[0].mxu0
    %v1127 = vpop.f32.mrb[0].mxu0
    %v1128 = vadd.f32 0.0, %v1127
    %v1129 = vpop.f32.mrb[0].mxu0
    %1130 = vmatprep.mubr.bf16.mxu0 %v1070
    %1131 = vmatmul.mubr.bf16.gmra.mrb[0].mxu0 %v950
    %v1132 = vpop.f32.mrb[0].mxu0
    %v1133 = vadd.f32 0.0, %v1132
    %v1134 = vpop.f32.mrb[0].mxu0
    %v1135 = vpop.f32.mrb[0].mxu0
    %v1136 = vadd.f32 0.0, %v1135
    %v1137 = vpop.f32.mrb[0].mxu0
    %1138 = vmatprep.mubr.bf16.mxu0 %v1073
    %1139 = vmatmul.mubr.bf16.gmra.mrb[0].mxu0 %v953
    %v1140 = vpop.f32.mrb[0].mxu0
    %v1141 = vadd.f32 0.0, %v1140
    %v1142 = vpop.f32.mrb[0].mxu0
    %v1143 = vpop.f32.mrb[0].mxu0
    %v1144 = vadd.f32 0.0, %v1143
    %v1145 = vpop.f32.mrb[0].mxu0
    %1146 = vmatprep.mubr.bf16.mxu0 %v1076
    %1147 = vmatmul.mubr.bf16.gmra.mrb[0].mxu0 %v956
    %v1148 = vpop.f32.mrb[0].mxu0
    %v1149 = vadd.f32 0.0, %v1148
    %v1150 = vpop.f32.mrb[0].mxu0
    %v1151 = vpop.f32.mrb[0].mxu0
    %v1152 = vadd.f32 0.0, %v1151
    %v1153 = vpop.f32.mrb[0].mxu0
    %1154 = vmatprep.mubr.bf16.mxu0 %v1079
    %1155 = vmatmul.mubr.bf16.gmra.mrb[0].mxu0 %v959
    %v1156 = vpop.f32.mrb[0].mxu0
    %v1157 = vadd.f32 0.0, %v1156
    %v1158 = vpop.f32.mrb[0].mxu0
    %v1159 = vpop.f32.mrb[0].mxu0
    %v1160 = vadd.f32 0.0, %v1159
    %v1161 = vpop.f32.mrb[0].mxu0
    %1162 = vmatprep.mubr.bf16.mxu0 %v1082
    %1163 = vmatmul.mubr.bf16.gmra.mrb[0].mxu0 %v962
    %v1164 = vpop.f32.mrb[0].mxu0
    %v1165 = vadd.f32 0.0, %v1164
    %v1166 = vpop.f32.mrb[0].mxu0
    %v1167 = vpop.f32.mrb[0].mxu0
    %v1168 = vadd.f32 0.0, %v1167
    %v1169 = vpop.f32.mrb[0].mxu0
    %1170 = vmatprep.mubr.bf16.mxu0 %v1085
    %1171 = vmatmul.mubr.bf16.gmra.mrb[0].mxu0 %v965
    %v1172 = vpop.f32.mrb[0].mxu0
    %v1173 = vadd.f32 0.0, %v1172
    %v1174 = vpop.f32.mrb[0].mxu0
    %v1175 = vpop.f32.mrb[0].mxu0
    %v1176 = vadd.f32 0.0, %v1175
    %v1177 = vpop.f32.mrb[0].mxu0
    %1178 = vmatprep.mubr.bf16.mxu0 %v1088
    %1179 = vmatmul.mubr.bf16.gmra.mrb[0].mxu0 %v968
    %v1180 = vpop.f32.mrb[0].mxu0
    %v1181 = vadd.f32 0.0, %v1180
    %v1182 = vpop.f32.mrb[0].mxu0
    %v1183 = vpop.f32.mrb[0].mxu0
    %v1184 = vadd.f32 0.0, %v1183
    %v1185 = vpop.f32.mrb[0].mxu0
    %1186 = vdwg.mxu0
    %v1187 = vld [vmem:[%s4] sm:$0x1]
    %v1189 = vlaneseq
    %v1190 = vshrl.u32 %v1189, 7
    %v1191 = vsub.s32 0, %v1190
    %v1192 = vrot.slane %v1187, %v1191
    %v1194 = vadd.f32 %v1125, %v1192
    %v1195 = vadd.f32 %v1128, %v1192
    %v1196 = vadd.f32 %v1133, %v1192
    %v1197 = vadd.f32 %v1136, %v1192
    %v1198 = vadd.f32 %v1141, %v1192
    %v1199 = vadd.f32 %v1144, %v1192
    %v1200 = vadd.f32 %v1149, %v1192
    %v1201 = vadd.f32 %v1152, %v1192
    %v1202 = vadd.f32 %v1157, %v1192
    %v1203 = vadd.f32 %v1160, %v1192
    %v1204 = vadd.f32 %v1165, %v1192
    %v1205 = vadd.f32 %v1168, %v1192
    %v1206 = vadd.f32 %v1173, %v1192
    %v1207 = vadd.f32 %v1176, %v1192
    %v1208 = vadd.f32 %v1181, %v1192
    %v1209 = vadd.f32 %v1184, %v1192
    %v1210 = vmax.f32 %v1194, 0.0
    %v1211 = vmax.f32 %v1195, 0.0
    %v1212 = vmax.f32 %v1196, 0.0
    %v1213 = vmax.f32 %v1197, 0.0
    %v1214 = vmax.f32 %v1198, 0.0
    %v1215 = vmax.f32 %v1199, 0.0
    %v1216 = vmax.f32 %v1200, 0.0
    %v1217 = vmax.f32 %v1201, 0.0
    %v1218 = vmax.f32 %v1202, 0.0
    %v1219 = vmax.f32 %v1203, 0.0
    %v1220 = vmax.f32 %v1204, 0.0
    %v1221 = vmax.f32 %v1205, 0.0
    %v1222 = vmax.f32 %v1206, 0.0
    %v1223 = vmax.f32 %v1207, 0.0
    %v1224 = vmax.f32 %v1208, 0.0
    %v1225 = vmax.f32 %v1209, 0.0
    %vm1226 = vcmask 1043456
    %v1227 = vsel %vm1226, %v1211, 0.0
    %v1228 = vadd.f32 %v1210, %v1227
    %v1229 = vrot.slane %v1228, 4
    %v1230 = vadd.f32 %v1228, %v1229
    %v1231 = vrot.slane %v1230, 2
    %v1232 = vadd.f32 %v1230, %v1231
    %v1233 = vrot.slane %v1232, 1
    %v1234 = vadd.f32 %v1232, %v1233
    %v1235 = vsel %vm1226, %v1213, 0.0
    %v1236 = vadd.f32 %v1212, %v1235
    %v1237 = vrot.slane %v1236, 4
    %v1238 = vadd.f32 %v1236, %v1237
    %v1239 = vrot.slane %v1238, 2
    %v1240 = vadd.f32 %v1238, %v1239
    %v1241 = vrot.slane %v1240, 1
    %v1242 = vadd.f32 %v1240, %v1241
    %v1243 = vsel %vm1226, %v1215, 0.0
    %v1244 = vadd.f32 %v1214, %v1243
    %v1245 = vrot.slane %v1244, 4
    %v1246 = vadd.f32 %v1244, %v1245
    %v1247 = vrot.slane %v1246, 2
    %v1248 = vadd.f32 %v1246, %v1247
    %v1249 = vrot.slane %v1248, 1
    %v1250 = vadd.f32 %v1248, %v1249
    %v1251 = vsel %vm1226, %v1217, 0.0
    %v1252 = vadd.f32 %v1216, %v1251
    %v1253 = vrot.slane %v1252, 4
    %v1254 = vadd.f32 %v1252, %v1253
    %v1255 = vrot.slane %v1254, 2
    %v1256 = vadd.f32 %v1254, %v1255
    %v1257 = vrot.slane %v1256, 1
    %v1258 = vadd.f32 %v1256, %v1257
    %v1259 = vsel %vm1226, %v1219, 0.0
    %v1260 = vadd.f32 %v1218, %v1259
    %v1261 = vrot.slane %v1260, 4
    %v1262 = vadd.f32 %v1260, %v1261
    %v1263 = vrot.slane %v1262, 2
    %v1264 = vadd.f32 %v1262, %v1263
    %v1265 = vrot.slane %v1264, 1
    %v1266 = vadd.f32 %v1264, %v1265
    %v1267 = vsel %vm1226, %v1221, 0.0
    %v1268 = vadd.f32 %v1220, %v1267
    %v1269 = vrot.slane %v1268, 4
    %v1270 = vadd.f32 %v1268, %v1269
    %v1271 = vrot.slane %v1270, 2
    %v1272 = vadd.f32 %v1270, %v1271
    %v1273 = vrot.slane %v1272, 1
    %v1274 = vadd.f32 %v1272, %v1273
    %v1275 = vsel %vm1226, %v1223, 0.0
    %v1276 = vadd.f32 %v1222, %v1275
    %v1277 = vrot.slane %v1276, 4
    %v1278 = vadd.f32 %v1276, %v1277
    %v1279 = vrot.slane %v1278, 2
    %v1280 = vadd.f32 %v1278, %v1279
    %v1281 = vrot.slane %v1280, 1
    %v1282 = vadd.f32 %v1280, %v1281
    %v1283 = vsel %vm1226, %v1225, 0.0
    %v1284 = vadd.f32 %v1224, %v1283
    %v1285 = vrot.slane %v1284, 4
    %v1286 = vadd.f32 %v1284, %v1285
    %v1287 = vrot.slane %v1286, 2
    %v1288 = vadd.f32 %v1286, %v1287
    %v1289 = vrot.slane %v1288, 1
    %v1290 = vadd.f32 %v1288, %v1289
    %v1291 = vpack.c.bf16 %v1234, %v1234
    %v1292 = vpack.c.bf16 %v1242, %v1242
    %v1293 = vpack.c.bf16 %v1250, %v1250
    %v1294 = vpack.c.bf16 %v1258, %v1258
    %v1295 = vpack.c.bf16 %v1266, %v1266
    %v1296 = vpack.c.bf16 %v1274, %v1274
    %v1297 = vpack.c.bf16 %v1282, %v1282
    %v1298 = vpack.c.bf16 %v1290, %v1290
    %v1299 = vld [vmem:[#allocation8] sm:$0xf]
    %v1300 = vld [vmem:[#allocation8 + $0x4] sm:$0xf]
    %v1301 = vld [vmem:[#allocation8 + $0x8] sm:$0xf]
    %v1302 = vld [vmem:[#allocation8 + $0xc] sm:$0xf]
    %v1303 = vld [vmem:[#allocation8 + $0x10] sm:$0xf]
    %v1304 = vld [vmem:[#allocation8 + $0x14] sm:$0xf]
    %v1305 = vld [vmem:[#allocation8 + $0x18] sm:$0xf]
    %v1306 = vld [vmem:[#allocation8 + $0x1c] sm:$0xf]
    %v1307 = vld [vmem:[#allocation8 + $0x20] sm:$0xf]
    %v1308 = vld [vmem:[#allocation8 + $0x24] sm:$0xf]
    %v1309 = vld [vmem:[#allocation8 + $0x28] sm:$0xf]
    %v1310 = vld [vmem:[#allocation8 + $0x2c] sm:$0xf]
    %v1311 = vld [vmem:[#allocation8 + $0x30] sm:$0xf]
    %v1312 = vld [vmem:[#allocation8 + $0x34] sm:$0xf]
    %v1313 = vld [vmem:[#allocation8 + $0x38] sm:$0xf]
    %v1314 = vld [vmem:[#allocation8 + $0x3c] sm:$0xf]
    %v1315 = vld [vmem:[%s6] sm:$0x1]
    %v1317 = vlaneseq
    %v1318 = vshrl.u32 %v1317, 7
    %v1319 = vsub.s32 0, %v1318
    %v1320 = vrot.slane %v1315, %v1319
    %v1330 = vunpack.c.l.b16 %v1291
    %v1331 = vunpack.c.l.b16 %v1292
    %v1332 = vunpack.c.l.b16 %v1293
    %v1333 = vunpack.c.l.b16 %v1294
    %v1334 = vunpack.c.l.b16 %v1295
    %v1335 = vunpack.c.l.b16 %v1296
    %v1336 = vunpack.c.l.b16 %v1297
    %v1337 = vunpack.c.l.b16 %v1298
    %vm1338 = vcmask 1041409
    %v1339 = vsel %vm1338, %v1331, %v1330
    %vm1340 = vcmask 1042434
    %v1341 = vsel %vm1340, %v1332, %v1339
    %vm1342 = vcmask 1043459
    %v1343 = vsel %vm1342, %v1333, %v1341
    %vm1344 = vcmask 1044484
    %v1345 = vsel %vm1344, %v1334, %v1343
    %vm1346 = vcmask 1045509
    %v1347 = vsel %vm1346, %v1335, %v1345
    %vm1348 = vcmask 1046534
    %v1349 = vsel %vm1348, %v1336, %v1347
    %vm1350 = vcmask 1047559
    %v1351 = vsel %vm1350, %v1337, %v1349
    %v1352 = vpack.c.b16 %v1351, %v1351
    %v1370 = vunpack.c.l.b16 %v1299
    %v1371 = vunpack.c.l.b16 %v1300
    %v1372 = vunpack.c.l.b16 %v1301
    %v1373 = vunpack.c.l.b16 %v1302
    %v1374 = vunpack.c.l.b16 %v1303
    %v1375 = vunpack.c.l.b16 %v1304
    %v1376 = vunpack.c.l.b16 %v1305
    %v1377 = vunpack.c.l.b16 %v1306
    %v1378 = vunpack.c.l.b16 %v1307
    %v1379 = vunpack.c.l.b16 %v1308
    %v1380 = vunpack.c.l.b16 %v1309
    %v1381 = vunpack.c.l.b16 %v1310
    %v1382 = vunpack.c.l.b16 %v1311
    %v1383 = vunpack.c.l.b16 %v1312
    %v1384 = vunpack.c.l.b16 %v1313
    %v1385 = vunpack.c.l.b16 %v1314
    %v1386 = vpack.c.b16 %v1371, %v1370
    %v1387 = vpack.c.b16 %v1373, %v1372
    %v1388 = vpack.c.b16 %v1375, %v1374
    %v1389 = vpack.c.b16 %v1377, %v1376
    %v1390 = vpack.c.b16 %v1379, %v1378
    %v1391 = vpack.c.b16 %v1381, %v1380
    %v1392 = vpack.c.b16 %v1383, %v1382
    %v1393 = vpack.c.b16 %v1385, %v1384
    %1402 = vmatprep.subr.bf16.mxu0 0
    %1403 = vmatpush1.bf16.msra.mxu0 %v1386
    %1404 = vmatprep.subr.bf16.mxu0 0
    %1405 = vmatpush1.bf16.msra.mxu0 %v1387
    %1406 = vmatprep.subr.bf16.mxu0 0
    %1407 = vmatpush1.bf16.msra.mxu0 %v1388
    %1408 = vmatprep.subr.bf16.mxu0 0
    %1409 = vmatpush1.bf16.msra.mxu0 %v1389
    %1410 = vmatprep.subr.bf16.mxu0 0
    %1411 = vmatpush1.bf16.msra.mxu0 %v1390
    %1412 = vmatprep.subr.bf16.mxu0 0
    %1413 = vmatpush1.bf16.msra.mxu0 %v1391
    %1414 = vmatprep.subr.bf16.mxu0 0
    %1415 = vmatpush1.bf16.msra.mxu0 %v1392
    %1416 = vmatprep.subr.bf16.mxu0 0
    %1417 = vmatpush1.bf16.msra.mxu0 %v1393
    %1418 = vmatprep.subr.bf16.mxu0 0
    %1419 = vmatpush1.bf16.msra.mxu0 0
    %1420 = vmatprep.subr.bf16.mxu0 0
    %1421 = vmatpush1.bf16.msra.mxu0 0
    %1422 = vmatprep.subr.bf16.mxu0 0
    %1423 = vmatpush1.bf16.msra.mxu0 0
    %1424 = vmatprep.subr.bf16.mxu0 0
    %1425 = vmatpush1.bf16.msra.mxu0 0
    %1426 = vmatprep.subr.bf16.mxu0 0
    %1427 = vmatpush1.bf16.msra.mxu0 0
    %1428 = vmatprep.subr.bf16.mxu0 0
    %1429 = vmatpush1.bf16.msra.mxu0 0
    %1430 = vmatprep.subr.bf16.mxu0 0
    %1431 = vmatpush1.bf16.msra.mxu0 0
    %1432 = vmatprep.subr.bf16.mxu0 0
    %1433 = vmatpush1.bf16.msra.mxu0 0
    %1434 = vmatprep.mubr.bf16.mxu0 0
    %1435 = vmatmul.mubr.bf16.gmra.mrb[0].mxu0 %v1352
    %v1436 = vpop.f32.mrb[0].mxu0
    %v1437 = vadd.f32 %v1320, %v1436
    %v1438 = vpop.f32.mrb[0].mxu0
    %v1439 = vpop.f32.mrb[0].mxu0
    %v1440 = vpop.f32.mrb[0].mxu0
    %1441 = vdwg.mxu0
    %v1442 = vpack.c.bf16 %v1437, %v1437
    %v1443 = vld [vmem:[#allocation10] sm:$0xf]
    %v1444 = vld [vmem:[#allocation10 + $0x4] sm:$0xf]
    %v1445 = vld [vmem:[#allocation10 + $0x8] sm:$0xf]
    %v1446 = vld [vmem:[#allocation10 + $0xc] sm:$0xf]
    %v1447 = vld [vmem:[#allocation10 + $0x10] sm:$0xf]
    %v1448 = vld [vmem:[#allocation10 + $0x14] sm:$0xf]
    %v1449 = vld [vmem:[#allocation10 + $0x18] sm:$0xf]
    %v1450 = vld [vmem:[#allocation10 + $0x1c] sm:$0xf]
    %v1451 = vld [vmem:[#allocation10 + $0x20] sm:$0xf]
    %v1452 = vld [vmem:[#allocation10 + $0x24] sm:$0xf]
    %v1453 = vld [vmem:[#allocation10 + $0x28] sm:$0xf]
    %v1454 = vld [vmem:[#allocation10 + $0x2c] sm:$0xf]
    %v1455 = vld [vmem:[#allocation10 + $0x30] sm:$0xf]
    %v1456 = vld [vmem:[#allocation10 + $0x34] sm:$0xf]
    %v1457 = vld [vmem:[#allocation10 + $0x38] sm:$0xf]
    %v1458 = vld [vmem:[#allocation10 + $0x3c] sm:$0xf]
    %v1459 = vld [vmem:[%s8] sm:$0x1]
    %v1461 = vlaneseq
    %v1462 = vshrl.u32 %v1461, 7
    %v1463 = vsub.s32 0, %v1462
    %v1464 = vrot.slane %v1459, %v1463
    %v1482 = vunpack.c.l.b16 %v1443
    %v1483 = vunpack.c.l.b16 %v1444
    %v1484 = vunpack.c.l.b16 %v1445
    %v1485 = vunpack.c.l.b16 %v1446
    %v1486 = vunpack.c.l.b16 %v1447
    %v1487 = vunpack.c.l.b16 %v1448
    %v1488 = vunpack.c.l.b16 %v1449
    %v1489 = vunpack.c.l.b16 %v1450
    %v1490 = vunpack.c.l.b16 %v1451
    %v1491 = vunpack.c.l.b16 %v1452
    %v1492 = vunpack.c.l.b16 %v1453
    %v1493 = vunpack.c.l.b16 %v1454
    %v1494 = vunpack.c.l.b16 %v1455
    %v1495 = vunpack.c.l.b16 %v1456
    %v1496 = vunpack.c.l.b16 %v1457
    %v1497 = vunpack.c.l.b16 %v1458
    %v1498 = vpack.c.b16 %v1483, %v1482
    %v1499 = vpack.c.b16 %v1485, %v1484
    %v1500 = vpack.c.b16 %v1487, %v1486
    %v1501 = vpack.c.b16 %v1489, %v1488
    %v1502 = vpack.c.b16 %v1491, %v1490
    %v1503 = vpack.c.b16 %v1493, %v1492
    %v1504 = vpack.c.b16 %v1495, %v1494
    %v1505 = vpack.c.b16 %v1497, %v1496
    %1514 = vmatprep.subr.bf16.mxu0 0
    %1515 = vmatpush1.bf16.msra.mxu0 %v1498
    %1516 = vmatprep.subr.bf16.mxu0 0
    %1517 = vmatpush1.bf16.msra.mxu0 %v1499
    %1518 = vmatprep.subr.bf16.mxu0 0
    %1519 = vmatpush1.bf16.msra.mxu0 %v1500
    %1520 = vmatprep.subr.bf16.mxu0 0
    %1521 = vmatpush1.bf16.msra.mxu0 %v1501
    %1522 = vmatprep.subr.bf16.mxu0 0
    %1523 = vmatpush1.bf16.msra.mxu0 %v1502
    %1524 = vmatprep.subr.bf16.mxu0 0
    %1525 = vmatpush1.bf16.msra.mxu0 %v1503
    %1526 = vmatprep.subr.bf16.mxu0 0
    %1527 = vmatpush1.bf16.msra.mxu0 %v1504
    %1528 = vmatprep.subr.bf16.mxu0 0
    %1529 = vmatpush1.bf16.msra.mxu0 %v1505
    %1530 = vmatprep.subr.bf16.mxu0 0
    %1531 = vmatpush1.bf16.msra.mxu0 0
    %1532 = vmatprep.subr.bf16.mxu0 0
    %1533 = vmatpush1.bf16.msra.mxu0 0
    %1534 = vmatprep.subr.bf16.mxu0 0
    %1535 = vmatpush1.bf16.msra.mxu0 0
    %1536 = vmatprep.subr.bf16.mxu0 0
    %1537 = vmatpush1.bf16.msra.mxu0 0
    %1538 = vmatprep.subr.bf16.mxu0 0
    %1539 = vmatpush1.bf16.msra.mxu0 0
    %1540 = vmatprep.subr.bf16.mxu0 0
    %1541 = vmatpush1.bf16.msra.mxu0 0
    %1542 = vmatprep.subr.bf16.mxu0 0
    %1543 = vmatpush1.bf16.msra.mxu0 0
    %1544 = vmatprep.subr.bf16.mxu0 0
    %1545 = vmatpush1.bf16.msra.mxu0 0
    %1546 = vmatprep.mubr.bf16.mxu0 0
    %1547 = vmatmul.mubr.bf16.gmra.mrb[0].mxu0 %v1442
    %v1548 = vpop.f32.mrb[0].mxu0
    %v1549 = vadd.f32 %v1464, %v1548
    %v1550 = vpop.f32.mrb[0].mxu0
    %v1551 = vpop.f32.mrb[0].mxu0
    %v1552 = vpop.f32.mrb[0].mxu0
    %1553 = vdwg.mxu0
    %1554 = vmax.xlane.f32.xlu0 %v1549
    %v1555 = vpop.xlane.xlu0 %1554
    %v1556 = vsub.f32 %v1549, %v1555
    %v1557 = vmul.f32 %v1556, 1.442695
    %v1558 = vpow.pop %v1557
    %1559 = vadd.xlane.f32.xlu0 %v1558
    %v1560 = vpop.xlane.xlu0 %1559
    %v1561 = vrcp.pop %v1560
    %v1562 = vmul.f32 %v1558, %v1561
    %1563 = vst [vmem:[#allocation11] sm:$0xff] %v1562
    // Predicated region
    $region58: #{tpu_custom_call.1} parent=1 // pred_check
      _
    $region59: #{tpu_custom_call.1} parent=1 // pred_check_branch
      %1565 = sbr.rel (0) target = $region61
    $region60: #{tpu_custom_call.1} parent=1 // pred_region
      %s1567 = ssub.s32 128, 128
      %1568 = vsyncadd [#allocation4], %s1567
      %s1570 = sshll.u32 [#allocation11], 4
      %s1571 = int_to_ptr.vmem [resolvable:$true] %s1570
      %1573 = dma.vmem_to_hbm [thread:$0]  %s1571, 128, %s9, [#allocation4]
    $region61: #{tpu_custom_call.1} parent=1 // pred_fallthru
      _
    // Predicated region
    $region62: #{tpu_custom_call.1} parent=1 // pred_check
      _
    $region63: #{tpu_custom_call.1} parent=1 // pred_check_branch
      %1575 = sbr.rel (0) target = $region65
    $region64: #{tpu_custom_call.1} parent=1 // pred_region
      %1576 = dma.done [#allocation4], 128
    $region65: #{tpu_custom_call.1} parent=1 // pred_fallthru
      _
    %1577 = vsyncpa [#allocation3], 1
    %1578 = vsyncpa [#allocation6], 1
    %1579 = vsyncpa [#allocation9], 1
    %1580 = vsyncpa [#allocation4], 1

</llo_original>
